<compile_context>
chip_gen: v6e
topology: v6e:2x2x1
jax: 0.10.0
libtpu: 0.0.40
codegen_flags: <defaults>
</compile_context>

<pallas_src>
import functools

import jax
import jax.numpy as jnp
from jax.experimental import pallas as pl
from jax.experimental.pallas import tpu as pltpu


# -----------------------------------------------------------------------------
# Model hyper-parameters (small, synthetic "ViT")
# -----------------------------------------------------------------------------
B = 2            # batch
C = 3            # image channels
HW = 16          # image height == width
P = 8            # patch size
NP = (HW // P) ** 2          # number of patches = 4
S = NP + 1                   # real sequence length (CLS + patches) = 5
S_PAD = 8                    # padded to a full sublane
D = 32                       # hidden size
NHEADS = 2
DH = D // NHEADS             # head dim = 16
FF = 64                      # MLP hidden
L = 2                        # number of transformer layers
LN_EPS = 1e-12               # HF ViT layer-norm eps
CPP = C * P * P              # flattened patch length = 192
OUT_ROWS = S_PAD             # lane/sublane-dense output block
OUT_LANES = 128


# -----------------------------------------------------------------------------
# Packed-parameter layout (static row offsets, shared by init and kernel)
# -----------------------------------------------------------------------------
def _build_layout32():
    layout = {}
    row = [0]

    def add(name, nrows=1, align=1):
        if align > 1:
            row[0] = ((row[0] + align - 1) // align) * align
        layout[name] = row[0]
        row[0] += nrows

    add("w_pe", CPP, 8)          # patch-embed weight (192, 32)
    add("pos", S_PAD, 8)         # position embeddings, zero-padded past S
    for nm in ("b_pe", "cls", "lnfg", "lnfb", "w_cls", "b_cls"):
        add(nm)
    for l in range(L):
        add(f"wo{l}", D, 8)      # attention output projection (32, 32)
        add(f"w2{l}", FF, 8)     # MLP down projection (64, 32)
        for nm in (f"ln1g{l}", f"ln1b{l}", f"ln2g{l}", f"ln2b{l}",
                   f"bq{l}", f"bk{l}", f"bv{l}", f"bo{l}", f"b2{l}"):
            add(nm)
    total = ((row[0] + 7) // 8) * 8
    return layout, total


LAYOUT32, BLOB32_ROWS = _build_layout32()
BLOB96_ROWS = L * D                         # per-layer fused (D, 3D) QKV weights
BLOB64_ROWS = ((L * D + L + 7) // 8) * 8    # per-layer (D, FF) w1 + (1, FF) b1


def _ln(x, g, b, eps=LN_EPS):
    mu = jnp.mean(x, axis=-1, keepdims=True)
    var = jnp.mean((x - mu) ** 2, axis=-1, keepdims=True)
    return (x - mu) * jax.lax.rsqrt(var + eps) * g + b


# -----------------------------------------------------------------------------
# Fused kernel: patch embed -> token assembly -> L transformer blocks ->
#               final LN (CLS only) -> linear decision head
# -----------------------------------------------------------------------------
def fused_vit_kernel(patches_ref, blob32_ref, blob96_ref, blob64_ref,
                     feat_ref, pred_ref):
    f32 = jnp.float32
    bf16 = jnp.bfloat16

    def row(name, n=1):                      # static sublane slice of blob32
        off = LAYOUT32[name]
        return blob32_ref[off:off + n, :]

    # ---- patch embedding (Conv2d stride=P == matmul on flattened patches) ----
    w_pe = row("w_pe", CPP)                                          # (192, 32)
    tok = (jnp.dot(patches_ref[...].astype(bf16), w_pe.astype(bf16),
                   preferred_element_type=f32) + row("b_pe"))        # (B*NP, D)

    # ---- assemble the padded token sequence purely in registers ----
    pos = row("pos", S_PAD)                                          # (8, 32)
    cls_row = row("cls")                                             # (1, 32)
    zero_rows = jnp.zeros((S_PAD - 1 - NP, D), f32)
    seqs = []
    for b in range(B):                                               # static, B=2
        seqs.append(jnp.concatenate(
            [cls_row, tok[b * NP:(b + 1) * NP, :], zero_rows], axis=0) + pos)
    xf = jnp.concatenate(seqs, axis=0)                               # (B*S_PAD, D)

    # multiplicative pad-key mask (post-LN 0.02-std scores are tiny; no row-max)
    key_pos = jax.lax.broadcasted_iota(jnp.int32, (1, 1, S_PAD), 2)
    key_mask = (key_pos < S).astype(f32)

    scale = 1.0 / (DH ** 0.5)
    for l in range(L):                                               # static layers
        # --- self attention (pre-norm), fused QKV projection ---
        y = _ln(xf, row(f"ln1g{l}"), row(f"ln1b{l}"))
        wqkv = blob96_ref[l * D:(l + 1) * D, :]                      # (32, 96)
        qkv = jnp.dot(y.astype(bf16), wqkv.astype(bf16),
                      preferred_element_type=f32)                    # (16, 96)
        q = (qkv[:, 0:D] + row(f"bq{l}")).reshape(B, S_PAD, D)
        k = (qkv[:, D:2 * D] + row(f"bk{l}")).reshape(B, S_PAD, D)
        v = (qkv[:, 2 * D:3 * D] + row(f"bv{l}")).reshape(B, S_PAD, D)

        attn = jnp.zeros((B * S_PAD, D), f32)
        wo_off = LAYOUT32[f"wo{l}"]
        for h in range(NHEADS):                                      # static heads
            lo = h * DH
            qh = q[:, :, lo:lo + DH]
            kh = k[:, :, lo:lo + DH]
            vh = v[:, :, lo:lo + DH]
            s = jnp.einsum('bqd,bkd->bqk', qh, kh,
                           preferred_element_type=f32) * scale
            p = jnp.exp(s) * key_mask                                # mask pad keys
            p = p * pl.reciprocal(jnp.sum(p, axis=-1, keepdims=True), approx=True)
            ctx = jnp.einsum('bqk,bkd->bqd', p, vh,
                             preferred_element_type=f32).reshape(B * S_PAD, DH)
            wo_h = blob32_ref[wo_off + lo:wo_off + lo + DH, :]       # (DH, D) rows
            attn = attn + jnp.dot(ctx.astype(bf16), wo_h.astype(bf16),
                                  preferred_element_type=f32)
        xf = xf + attn + row(f"bo{l}")                               # residual

        # --- MLP (pre-norm) ---
        y = _ln(xf, row(f"ln2g{l}"), row(f"ln2b{l}"))
        w1 = blob64_ref[l * D:(l + 1) * D, :]                        # (32, 64)
        b1 = blob64_ref[L * D + l:L * D + l + 1, :]                  # (1, 64)
        h1 = jnp.dot(y.astype(bf16), w1.astype(bf16),
                     preferred_element_type=f32) + b1
        # TODO(synk): HF ViT's default hidden_act='gelu' is the exact erf GELU;
        # the tanh approximation is used for a guaranteed Mosaic lowering.
        h1 = jax.nn.gelu(h1, approximate=True)
        w2 = row(f"w2{l}", FF)                                       # (64, 32)
        h2 = jnp.dot(h1.astype(bf16), w2.astype(bf16),
                     preferred_element_type=f32) + row(f"b2{l}")
        xf = xf + h2                                                 # residual

    # final LayerNorm only on the CLS rows (LN is row-wise, so this matches
    # applying it to the full sequence and slicing CLS afterwards)
    cls_rows = jnp.concatenate(
        [xf[b * S_PAD:b * S_PAD + 1, :] for b in range(B)], axis=0)  # (B, D)
    feat = _ln(cls_rows, row("lnfg"), row("lnfb"))

    # lane-dense, sublane-full (8, 128) feature store (padding is zero)
    feat_wide = jnp.concatenate(
        [feat, jnp.zeros((B, OUT_LANES - D), f32)], axis=1)
    feat_wide = jnp.concatenate(
        [feat_wide, jnp.zeros((OUT_ROWS - B, OUT_LANES), f32)], axis=0)
    feat_ref[...] = feat_wide

    # linear decision head on the VPU (multiply + lane reduce), 1 = Fake / 0 = Real
    dec = (jnp.sum(feat * row("w_cls"), axis=-1, keepdims=True)
           + row("b_cls")[:, 0:1])                                   # (B, 1)
    dec_full = jnp.concatenate(
        [dec, jnp.full((OUT_ROWS - B, 1), -1.0, f32)], axis=0)       # pad rows -> 0
    pred_ref[...] = jnp.where(
        jnp.broadcast_to(dec_full, (OUT_ROWS, OUT_LANES)) > 0.0,
        1, 0).astype(jnp.int32)


def fused_forward(patches, params):
    vmem = pltpu.MemorySpace.VMEM
    return pl.pallas_call(
        fused_vit_kernel,
        out_shape=(jax.ShapeDtypeStruct((OUT_ROWS, OUT_LANES), jnp.float32),
                   jax.ShapeDtypeStruct((OUT_ROWS, OUT_LANES), jnp.int32)),
        in_specs=[pl.BlockSpec(memory_space=vmem)] * 4,
        out_specs=(pl.BlockSpec(memory_space=vmem),
                   pl.BlockSpec(memory_space=vmem)),
    )(patches, params["blob32"], params["blob96"], params["blob64"])


# -----------------------------------------------------------------------------
# Glue: packed parameter init, patch extraction, full forward
# -----------------------------------------------------------------------------
def init_params(key):
    std = 0.02
    keys = iter(jax.random.split(key, 32))

    def nrm(shape):
        return (std * jax.random.normal(next(keys), shape)).astype(jnp.float32)

    blob32 = jnp.zeros((BLOB32_ROWS, D), jnp.float32)

    def put(blob, name, val):
        off = LAYOUT32[name]
        return blob.at[off:off + val.shape[0], :].set(val)

    blob32 = put(blob32, "w_pe", nrm((CPP, D)))
    pos = jnp.concatenate(
        [nrm((S, D)), jnp.zeros((S_PAD - S, D), jnp.float32)], axis=0)
    blob32 = put(blob32, "pos", pos)
    blob32 = put(blob32, "cls", nrm((1, D)))
    blob32 = put(blob32, "lnfg", jnp.ones((1, D), jnp.float32))
    blob32 = put(blob32, "w_cls", nrm((1, D)))
    # b_pe / lnfb / b_cls and all per-layer biases stay zero.

    wqkv_rows = []
    blob64 = jnp.zeros((BLOB64_ROWS, FF), jnp.float32)
    for l in range(L):
        blob32 = put(blob32, f"wo{l}", nrm((D, D)))
        blob32 = put(blob32, f"w2{l}", nrm((FF, D)))
        blob32 = put(blob32, f"ln1g{l}", jnp.ones((1, D), jnp.float32))
        blob32 = put(blob32, f"ln2g{l}", jnp.ones((1, D), jnp.float32))
        wqkv_rows.append(jnp.concatenate(
            [nrm((D, D)), nrm((D, D)), nrm((D, D))], axis=1))        # (D, 3D)
        blob64 = blob64.at[l * D:(l + 1) * D, :].set(nrm((D, FF)))
        # b1 row (index L*D + l) stays zero.
    blob96 = jnp.concatenate(wqkv_rows, axis=0)                      # (L*D, 3D)

    return {"blob32": blob32, "blob96": blob96, "blob64": blob64}


def extract_patches(x):
    # x: (B, C, H, W) NCHW -> (B*NP, C*P*P), flatten order (c, ph, pw)
    b, c, h, w = x.shape
    gh, gw = h // P, w // P
    x = x.reshape(b, c, gh, P, gw, P)
    x = jnp.transpose(x, (0, 2, 4, 1, 3, 5))        # (B, gh, gw, C, P, P)
    return x.reshape(b * gh * gw, c * P * P)


@functools.partial(jax.jit, static_argnames=("return_feature",))
def vit_contrastive_forward(x, params, return_feature=False):
    """Mirrors VITContrastiveHF.forward (linear classifier variant)."""
    patches = extract_patches(x)                     # (B*NP, C*P*P)
    feat_wide, pred_wide = fused_forward(patches, params)
    if return_feature:
        return feat_wide[:B, :D]                     # CLS features (B, D)
    # TODO(synk): sklearn svm/knn classifiers have no clean Pallas analogue;
    # a fused linear decision head (0 = Real, 1 = Fake) is used instead.
    return pred_wide[:B, 0]                          # (B,) int32


if __name__ == "__main__":
    key = jax.random.PRNGKey(0)
    k_param, k_x = jax.random.split(key)
    params = init_params(k_param)
    x = jax.random.normal(k_x, (B, C, HW, HW), dtype=jnp.float32)  # NCHW input

    feats = vit_contrastive_forward(x, params, return_feature=True)
    preds = vit_contrastive_forward(x, params, return_feature=False)
    jax.block_until_ready(feats)
    jax.block_until_ready(preds)

    assert feats.shape == (B, D) and feats.dtype == jnp.float32
    assert preds.shape == (B,) and preds.dtype == jnp.int32
    assert bool(jnp.all(jnp.isfinite(feats)))
    assert bool(jnp.all((preds == 0) | (preds == 1)))
    print("KERNEL_OK")
</pallas_src>

<mosaic_0001>
module attributes {stable_mosaic.version = 11 : i64} {
  func.func @fused_vit_kernel(%arg0: memref<8x192xf32, #tpu.memory_space<vmem>>, %arg1: memref<432x32xf32, #tpu.memory_space<vmem>>, %arg2: memref<64x96xf32, #tpu.memory_space<vmem>>, %arg3: memref<72x64xf32, #tpu.memory_space<vmem>>, %arg4: memref<8x128xf32, #tpu.memory_space<vmem>>, %arg5: memref<8x128xi32, #tpu.memory_space<vmem>>) attributes {dimension_semantics = [], scalar_prefetch = 0 : i64, scratch_operands = 0 : i64, tpu.core_type = #tpu.core_type<tc>} {
    %c0 = arith.constant 0 : index
    %c0_0 = arith.constant 0 : index
    %0 = vector.load %arg1[%c0, %c0_0] : memref<432x32xf32, #tpu.memory_space<vmem>>, vector<192x32xf32>
    %c0_1 = arith.constant 0 : index
    %c0_2 = arith.constant 0 : index
    %1 = vector.load %arg0[%c0_1, %c0_2] : memref<8x192xf32, #tpu.memory_space<vmem>>, vector<8x192xf32>
    %2 = arith.truncf %1 : vector<8x192xf32> to vector<8x192xbf16>
    %3 = arith.truncf %0 : vector<192x32xf32> to vector<192x32xbf16>
    %cst = arith.constant dense<0.000000e+00> : vector<8x32xf32>
    %4 = tpu.matmul %2, %3, %cst {dimension_numbers = #tpu.dot_dimension_numbers<[1], [0], [0], [1], [0, 0, 1, 1], [], []>} : vector<8x192xbf16>, vector<192x32xbf16>, vector<8x32xf32> -> vector<8x32xf32>
    %c200 = arith.constant 200 : index
    %c0_3 = arith.constant 0 : index
    %5 = vector.load %arg1[%c200, %c0_3] : memref<432x32xf32, #tpu.memory_space<vmem>>, vector<1x32xf32>
    %6 = vector.broadcast %5 : vector<1x32xf32> to vector<8x32xf32>
    %7 = arith.addf %4, %6 : vector<8x32xf32>
    %c192 = arith.constant 192 : index
    %c0_4 = arith.constant 0 : index
    %8 = vector.load %arg1[%c192, %c0_4] : memref<432x32xf32, #tpu.memory_space<vmem>>, vector<8x32xf32>
    %c201 = arith.constant 201 : index
    %c0_5 = arith.constant 0 : index
    %9 = vector.load %arg1[%c201, %c0_5] : memref<432x32xf32, #tpu.memory_space<vmem>>, vector<1x32xf32>
    %cst_6 = arith.constant 0.000000e+00 : f32
    %10 = vector.broadcast %cst_6 : f32 to vector<3x32xf32>
    %11 = vector.extract_strided_slice %7 {offsets = [0, 0], sizes = [4, 32], strides = [1, 1]} : vector<8x32xf32> to vector<4x32xf32>
    %12 = tpu.concatenate %9, %11, %10 in 0 : vector<1x32xf32>, vector<4x32xf32>, vector<3x32xf32> -> vector<8x32xf32>
    %13 = arith.addf %12, %8 : vector<8x32xf32>
    %14 = vector.extract_strided_slice %7 {offsets = [4, 0], sizes = [4, 32], strides = [1, 1]} : vector<8x32xf32> to vector<4x32xf32>
    %15 = tpu.concatenate %9, %14, %10 in 0 : vector<1x32xf32>, vector<4x32xf32>, vector<3x32xf32> -> vector<8x32xf32>
    %16 = arith.addf %15, %8 : vector<8x32xf32>
    %17 = tpu.concatenate %13, %16 in 0 : vector<8x32xf32>, vector<8x32xf32> -> vector<16x32xf32>
    %18 = tpu.iota {dimensions = array<i32: 2>} : vector<1x1x8xi32>
    %c5_i32 = arith.constant 5 : i32
    %19 = vector.broadcast %c5_i32 : i32 to vector<1x1x8xi32>
    %20 = arith.cmpi slt, %18, %19 : vector<1x1x8xi32>
    %21 = arith.extui %20 : vector<1x1x8xi1> to vector<1x1x8xi32>
    %22 = arith.sitofp %21 : vector<1x1x8xi32> to vector<1x1x8xf32>
    %c304 = arith.constant 304 : index
    %c0_7 = arith.constant 0 : index
    %23 = vector.load %arg1[%c304, %c0_7] : memref<432x32xf32, #tpu.memory_space<vmem>>, vector<1x32xf32>
    %c305 = arith.constant 305 : index
    %c0_8 = arith.constant 0 : index
    %24 = vector.load %arg1[%c305, %c0_8] : memref<432x32xf32, #tpu.memory_space<vmem>>, vector<1x32xf32>
    %cst_9 = arith.constant dense<0.000000e+00> : vector<16xf32>
    %25 = vector.multi_reduction <add>, %17, %cst_9 [1] : vector<16x32xf32> to vector<16xf32>
    %26 = vector.shape_cast %25 : vector<16xf32> to vector<16x1xf32>
    %cst_10 = arith.constant 3.200000e+01 : f32
    %27 = vector.broadcast %cst_10 : f32 to vector<16x1xf32>
    %28 = arith.divf %26, %27 : vector<16x1xf32>
    %29 = vector.broadcast %28 : vector<16x1xf32> to vector<16x32xf32>
    %30 = arith.subf %17, %29 : vector<16x32xf32>
    %31 = arith.mulf %30, %30 : vector<16x32xf32>
    %cst_11 = arith.constant dense<0.000000e+00> : vector<16xf32>
    %32 = vector.multi_reduction <add>, %31, %cst_11 [1] : vector<16x32xf32> to vector<16xf32>
    %33 = vector.shape_cast %32 : vector<16xf32> to vector<16x1xf32>
    %cst_12 = arith.constant 3.200000e+01 : f32
    %34 = vector.broadcast %cst_12 : f32 to vector<16x1xf32>
    %35 = arith.divf %33, %34 : vector<16x1xf32>
    %36 = vector.broadcast %28 : vector<16x1xf32> to vector<16x32xf32>
    %37 = arith.subf %17, %36 : vector<16x32xf32>
    %cst_13 = arith.constant 9.99999996E-13 : f32
    %38 = vector.broadcast %cst_13 : f32 to vector<16x1xf32>
    %39 = arith.addf %35, %38 : vector<16x1xf32>
    %40 = math.rsqrt %39 : vector<16x1xf32>
    %41 = vector.broadcast %40 : vector<16x1xf32> to vector<16x32xf32>
    %42 = arith.mulf %37, %41 : vector<16x32xf32>
    %43 = vector.broadcast %23 : vector<1x32xf32> to vector<16x32xf32>
    %44 = arith.mulf %42, %43 : vector<16x32xf32>
    %45 = vector.broadcast %24 : vector<1x32xf32> to vector<16x32xf32>
    %46 = arith.addf %44, %45 : vector<16x32xf32>
    %c0_14 = arith.constant 0 : index
    %c0_15 = arith.constant 0 : index
    %47 = vector.load %arg2[%c0_14, %c0_15] : memref<64x96xf32, #tpu.memory_space<vmem>>, vector<32x96xf32>
    %48 = arith.truncf %46 : vector<16x32xf32> to vector<16x32xbf16>
    %49 = arith.truncf %47 : vector<32x96xf32> to vector<32x96xbf16>
    %cst_16 = arith.constant dense<0.000000e+00> : vector<16x96xf32>
    %50 = tpu.matmul %48, %49, %cst_16 {dimension_numbers = #tpu.dot_dimension_numbers<[1], [0], [0], [1], [0, 0, 1, 1], [], []>} : vector<16x32xbf16>, vector<32x96xbf16>, vector<16x96xf32> -> vector<16x96xf32>
    %51 = vector.extract_strided_slice %50 {offsets = [0, 0], sizes = [16, 32], strides = [1, 1]} : vector<16x96xf32> to vector<16x32xf32>
    %c308 = arith.constant 308 : index
    %c0_17 = arith.constant 0 : index
    %52 = vector.load %arg1[%c308, %c0_17] : memref<432x32xf32, #tpu.memory_space<vmem>>, vector<1x32xf32>
    %53 = vector.broadcast %52 : vector<1x32xf32> to vector<16x32xf32>
    %54 = arith.addf %51, %53 : vector<16x32xf32>
    %55 = vector.shape_cast %54 : vector<16x32xf32> to vector<2x8x32xf32>
    %56 = vector.extract_strided_slice %50 {offsets = [0, 32], sizes = [16, 32], strides = [1, 1]} : vector<16x96xf32> to vector<16x32xf32>
    %c309 = arith.constant 309 : index
    %c0_18 = arith.constant 0 : index
    %57 = vector.load %arg1[%c309, %c0_18] : memref<432x32xf32, #tpu.memory_space<vmem>>, vector<1x32xf32>
    %58 = vector.broadcast %57 : vector<1x32xf32> to vector<16x32xf32>
    %59 = arith.addf %56, %58 : vector<16x32xf32>
    %60 = vector.shape_cast %59 : vector<16x32xf32> to vector<2x8x32xf32>
    %61 = vector.extract_strided_slice %50 {offsets = [0, 64], sizes = [16, 32], strides = [1, 1]} : vector<16x96xf32> to vector<16x32xf32>
    %c310 = arith.constant 310 : index
    %c0_19 = arith.constant 0 : index
    %62 = vector.load %arg1[%c310, %c0_19] : memref<432x32xf32, #tpu.memory_space<vmem>>, vector<1x32xf32>
    %63 = vector.broadcast %62 : vector<1x32xf32> to vector<16x32xf32>
    %64 = arith.addf %61, %63 : vector<16x32xf32>
    %65 = vector.shape_cast %64 : vector<16x32xf32> to vector<2x8x32xf32>
    %cst_20 = arith.constant 0.000000e+00 : f32
    %66 = vector.broadcast %cst_20 : f32 to vector<16x32xf32>
    %67 = vector.extract_strided_slice %55 {offsets = [0, 0, 0], sizes = [2, 8, 16], strides = [1, 1, 1]} : vector<2x8x32xf32> to vector<2x8x16xf32>
    %68 = vector.extract_strided_slice %60 {offsets = [0, 0, 0], sizes = [2, 8, 16], strides = [1, 1, 1]} : vector<2x8x32xf32> to vector<2x8x16xf32>
    %69 = vector.extract_strided_slice %65 {offsets = [0, 0, 0], sizes = [2, 8, 16], strides = [1, 1, 1]} : vector<2x8x32xf32> to vector<2x8x16xf32>
    "tpu.trace_start"() <{level = 10 : i32, message = "bqd,bkd->bqk"}> : () -> ()
    %cst_21 = arith.constant dense<0.000000e+00> : vector<2x8x8xf32>
    %70 = tpu.matmul %67, %68, %cst_21 {dimension_numbers = #tpu.dot_dimension_numbers<[2], [2], [1], [1], [0, 0, 0, 1, 1, 1], [0], [0]>} : vector<2x8x16xf32>, vector<2x8x16xf32>, vector<2x8x8xf32> -> vector<2x8x8xf32>
    "tpu.trace_stop"() : () -> ()
    %cst_22 = arith.constant 2.500000e-01 : f32
    %71 = vector.broadcast %cst_22 : f32 to vector<2x8x8xf32>
    %72 = arith.mulf %70, %71 : vector<2x8x8xf32>
    %73 = math.exp %72 : vector<2x8x8xf32>
    %74 = vector.broadcast %22 : vector<1x1x8xf32> to vector<2x8x8xf32>
    %75 = arith.mulf %73, %74 : vector<2x8x8xf32>
    %cst_23 = arith.constant dense<0.000000e+00> : vector<2x8xf32>
    %76 = vector.multi_reduction <add>, %75, %cst_23 [2] : vector<2x8x8xf32> to vector<2x8xf32>
    %77 = vector.shape_cast %76 : vector<2x8xf32> to vector<2x8x1xf32>
    %78 = tpu.reciprocal %77 {approx = true} : vector<2x8x1xf32> -> vector<2x8x1xf32>
    %79 = vector.broadcast %78 : vector<2x8x1xf32> to vector<2x8x8xf32>
    %80 = arith.mulf %75, %79 : vector<2x8x8xf32>
    "tpu.trace_start"() <{level = 10 : i32, message = "bqk,bkd->bqd"}> : () -> ()
    %cst_24 = arith.constant dense<0.000000e+00> : vector<2x8x16xf32>
    %81 = tpu.matmul %80, %69, %cst_24 {dimension_numbers = #tpu.dot_dimension_numbers<[2], [1], [1], [2], [0, 0, 0, 1, 1, 2], [0], [0]>} : vector<2x8x8xf32>, vector<2x8x16xf32>, vector<2x8x16xf32> -> vector<2x8x16xf32>
    "tpu.trace_stop"() : () -> ()
    %82 = vector.shape_cast %81 : vector<2x8x16xf32> to vector<16x16xf32>
    %c208 = arith.constant 208 : index
    %c0_25 = arith.constant 0 : index
    %83 = vector.load %arg1[%c208, %c0_25] : memref<432x32xf32, #tpu.memory_space<vmem>>, vector<16x32xf32>
    %84 = arith.truncf %82 : vector<16x16xf32> to vector<16x16xbf16>
    %85 = arith.truncf %83 : vector<16x32xf32> to vector<16x32xbf16>
    %cst_26 = arith.constant dense<0.000000e+00> : vector<16x32xf32>
    %86 = tpu.matmul %84, %85, %cst_26 {dimension_numbers = #tpu.dot_dimension_numbers<[1], [0], [0], [1], [0, 0, 1, 1], [], []>} : vector<16x16xbf16>, vector<16x32xbf16>, vector<16x32xf32> -> vector<16x32xf32>
    %87 = arith.addf %66, %86 : vector<16x32xf32>
    %88 = vector.extract_strided_slice %55 {offsets = [0, 0, 16], sizes = [2, 8, 16], strides = [1, 1, 1]} : vector<2x8x32xf32> to vector<2x8x16xf32>
    %89 = vector.extract_strided_slice %60 {offsets = [0, 0, 16], sizes = [2, 8, 16], strides = [1, 1, 1]} : vector<2x8x32xf32> to vector<2x8x16xf32>
    %90 = vector.extract_strided_slice %65 {offsets = [0, 0, 16], sizes = [2, 8, 16], strides = [1, 1, 1]} : vector<2x8x32xf32> to vector<2x8x16xf32>
    "tpu.trace_start"() <{level = 10 : i32, message = "bqd,bkd->bqk"}> : () -> ()
    %cst_27 = arith.constant dense<0.000000e+00> : vector<2x8x8xf32>
    %91 = tpu.matmul %88, %89, %cst_27 {dimension_numbers = #tpu.dot_dimension_numbers<[2], [2], [1], [1], [0, 0, 0, 1, 1, 1], [0], [0]>} : vector<2x8x16xf32>, vector<2x8x16xf32>, vector<2x8x8xf32> -> vector<2x8x8xf32>
    "tpu.trace_stop"() : () -> ()
    %cst_28 = arith.constant 2.500000e-01 : f32
    %92 = vector.broadcast %cst_28 : f32 to vector<2x8x8xf32>
    %93 = arith.mulf %91, %92 : vector<2x8x8xf32>
    %94 = math.exp %93 : vector<2x8x8xf32>
    %95 = vector.broadcast %22 : vector<1x1x8xf32> to vector<2x8x8xf32>
    %96 = arith.mulf %94, %95 : vector<2x8x8xf32>
    %cst_29 = arith.constant dense<0.000000e+00> : vector<2x8xf32>
    %97 = vector.multi_reduction <add>, %96, %cst_29 [2] : vector<2x8x8xf32> to vector<2x8xf32>
    %98 = vector.shape_cast %97 : vector<2x8xf32> to vector<2x8x1xf32>
    %99 = tpu.reciprocal %98 {approx = true} : vector<2x8x1xf32> -> vector<2x8x1xf32>
    %100 = vector.broadcast %99 : vector<2x8x1xf32> to vector<2x8x8xf32>
    %101 = arith.mulf %96, %100 : vector<2x8x8xf32>
    "tpu.trace_start"() <{level = 10 : i32, message = "bqk,bkd->bqd"}> : () -> ()
    %cst_30 = arith.constant dense<0.000000e+00> : vector<2x8x16xf32>
    %102 = tpu.matmul %101, %90, %cst_30 {dimension_numbers = #tpu.dot_dimension_numbers<[2], [1], [1], [2], [0, 0, 0, 1, 1, 2], [0], [0]>} : vector<2x8x8xf32>, vector<2x8x16xf32>, vector<2x8x16xf32> -> vector<2x8x16xf32>
    "tpu.trace_stop"() : () -> ()
    %103 = vector.shape_cast %102 : vector<2x8x16xf32> to vector<16x16xf32>
    %c224 = arith.constant 224 : index
    %c0_31 = arith.constant 0 : index
    %104 = vector.load %arg1[%c224, %c0_31] : memref<432x32xf32, #tpu.memory_space<vmem>>, vector<16x32xf32>
    %105 = arith.truncf %103 : vector<16x16xf32> to vector<16x16xbf16>
    %106 = arith.truncf %104 : vector<16x32xf32> to vector<16x32xbf16>
    %cst_32 = arith.constant dense<0.000000e+00> : vector<16x32xf32>
    %107 = tpu.matmul %105, %106, %cst_32 {dimension_numbers = #tpu.dot_dimension_numbers<[1], [0], [0], [1], [0, 0, 1, 1], [], []>} : vector<16x16xbf16>, vector<16x32xbf16>, vector<16x32xf32> -> vector<16x32xf32>
    %108 = arith.addf %87, %107 : vector<16x32xf32>
    %109 = arith.addf %17, %108 : vector<16x32xf32>
    %c311 = arith.constant 311 : index
    %c0_33 = arith.constant 0 : index
    %110 = vector.load %arg1[%c311, %c0_33] : memref<432x32xf32, #tpu.memory_space<vmem>>, vector<1x32xf32>
    %111 = vector.broadcast %110 : vector<1x32xf32> to vector<16x32xf32>
    %112 = arith.addf %109, %111 : vector<16x32xf32>
    %c306 = arith.constant 306 : index
    %c0_34 = arith.constant 0 : index
    %113 = vector.load %arg1[%c306, %c0_34] : memref<432x32xf32, #tpu.memory_space<vmem>>, vector<1x32xf32>
    %c307 = arith.constant 307 : index
    %c0_35 = arith.constant 0 : index
    %114 = vector.load %arg1[%c307, %c0_35] : memref<432x32xf32, #tpu.memory_space<vmem>>, vector<1x32xf32>
    %cst_36 = arith.constant dense<0.000000e+00> : vector<16xf32>
    %115 = vector.multi_reduction <add>, %112, %cst_36 [1] : vector<16x32xf32> to vector<16xf32>
    %116 = vector.shape_cast %115 : vector<16xf32> to vector<16x1xf32>
    %cst_37 = arith.constant 3.200000e+01 : f32
    %117 = vector.broadcast %cst_37 : f32 to vector<16x1xf32>
    %118 = arith.divf %116, %117 : vector<16x1xf32>
    %119 = vector.broadcast %118 : vector<16x1xf32> to vector<16x32xf32>
    %120 = arith.subf %112, %119 : vector<16x32xf32>
    %121 = arith.mulf %120, %120 : vector<16x32xf32>
    %cst_38 = arith.constant dense<0.000000e+00> : vector<16xf32>
    %122 = vector.multi_reduction <add>, %121, %cst_38 [1] : vector<16x32xf32> to vector<16xf32>
    %123 = vector.shape_cast %122 : vector<16xf32> to vector<16x1xf32>
    %cst_39 = arith.constant 3.200000e+01 : f32
    %124 = vector.broadcast %cst_39 : f32 to vector<16x1xf32>
    %125 = arith.divf %123, %124 : vector<16x1xf32>
    %126 = vector.broadcast %118 : vector<16x1xf32> to vector<16x32xf32>
    %127 = arith.subf %112, %126 : vector<16x32xf32>
    %cst_40 = arith.constant 9.99999996E-13 : f32
    %128 = vector.broadcast %cst_40 : f32 to vector<16x1xf32>
    %129 = arith.addf %125, %128 : vector<16x1xf32>
    %130 = math.rsqrt %129 : vector<16x1xf32>
    %131 = vector.broadcast %130 : vector<16x1xf32> to vector<16x32xf32>
    %132 = arith.mulf %127, %131 : vector<16x32xf32>
    %133 = vector.broadcast %113 : vector<1x32xf32> to vector<16x32xf32>
    %134 = arith.mulf %132, %133 : vector<16x32xf32>
    %135 = vector.broadcast %114 : vector<1x32xf32> to vector<16x32xf32>
    %136 = arith.addf %134, %135 : vector<16x32xf32>
    %c0_41 = arith.constant 0 : index
    %c0_42 = arith.constant 0 : index
    %137 = vector.load %arg3[%c0_41, %c0_42] : memref<72x64xf32, #tpu.memory_space<vmem>>, vector<32x64xf32>
    %c64 = arith.constant 64 : index
    %c0_43 = arith.constant 0 : index
    %138 = vector.load %arg3[%c64, %c0_43] : memref<72x64xf32, #tpu.memory_space<vmem>>, vector<1x64xf32>
    %139 = arith.truncf %136 : vector<16x32xf32> to vector<16x32xbf16>
    %140 = arith.truncf %137 : vector<32x64xf32> to vector<32x64xbf16>
    %cst_44 = arith.constant dense<0.000000e+00> : vector<16x64xf32>
    %141 = tpu.matmul %139, %140, %cst_44 {dimension_numbers = #tpu.dot_dimension_numbers<[1], [0], [0], [1], [0, 0, 1, 1], [], []>} : vector<16x32xbf16>, vector<32x64xbf16>, vector<16x64xf32> -> vector<16x64xf32>
    %142 = vector.broadcast %138 : vector<1x64xf32> to vector<16x64xf32>
    %143 = arith.addf %141, %142 : vector<16x64xf32>
    %144 = arith.mulf %143, %143 : vector<16x64xf32>
    %145 = arith.mulf %143, %144 : vector<16x64xf32>
    %cst_45 = arith.constant 4.471500e-02 : f32
    %146 = vector.broadcast %cst_45 : f32 to vector<16x64xf32>
    %147 = arith.mulf %146, %145 : vector<16x64xf32>
    %148 = arith.addf %143, %147 : vector<16x64xf32>
    %cst_46 = arith.constant 0.797884583 : f32
    %149 = vector.broadcast %cst_46 : f32 to vector<16x64xf32>
    %150 = arith.mulf %149, %148 : vector<16x64xf32>
    %151 = math.tanh %150 : vector<16x64xf32>
    %cst_47 = arith.constant 1.000000e+00 : f32
    %152 = vector.broadcast %cst_47 : f32 to vector<16x64xf32>
    %153 = arith.addf %152, %151 : vector<16x64xf32>
    %cst_48 = arith.constant 5.000000e-01 : f32
    %154 = vector.broadcast %cst_48 : f32 to vector<16x64xf32>
    %155 = arith.mulf %154, %153 : vector<16x64xf32>
    %156 = arith.mulf %143, %155 : vector<16x64xf32>
    %c240 = arith.constant 240 : index
    %c0_49 = arith.constant 0 : index
    %157 = vector.load %arg1[%c240, %c0_49] : memref<432x32xf32, #tpu.memory_space<vmem>>, vector<64x32xf32>
    %158 = arith.truncf %156 : vector<16x64xf32> to vector<16x64xbf16>
    %159 = arith.truncf %157 : vector<64x32xf32> to vector<64x32xbf16>
    %cst_50 = arith.constant dense<0.000000e+00> : vector<16x32xf32>
    %160 = tpu.matmul %158, %159, %cst_50 {dimension_numbers = #tpu.dot_dimension_numbers<[1], [0], [0], [1], [0, 0, 1, 1], [], []>} : vector<16x64xbf16>, vector<64x32xbf16>, vector<16x32xf32> -> vector<16x32xf32>
    %c312 = arith.constant 312 : index
    %c0_51 = arith.constant 0 : index
    %161 = vector.load %arg1[%c312, %c0_51] : memref<432x32xf32, #tpu.memory_space<vmem>>, vector<1x32xf32>
    %162 = vector.broadcast %161 : vector<1x32xf32> to vector<16x32xf32>
    %163 = arith.addf %160, %162 : vector<16x32xf32>
    %164 = arith.addf %112, %163 : vector<16x32xf32>
    %c416 = arith.constant 416 : index
    %c0_52 = arith.constant 0 : index
    %165 = vector.load %arg1[%c416, %c0_52] : memref<432x32xf32, #tpu.memory_space<vmem>>, vector<1x32xf32>
    %c417 = arith.constant 417 : index
    %c0_53 = arith.constant 0 : index
    %166 = vector.load %arg1[%c417, %c0_53] : memref<432x32xf32, #tpu.memory_space<vmem>>, vector<1x32xf32>
    %cst_54 = arith.constant dense<0.000000e+00> : vector<16xf32>
    %167 = vector.multi_reduction <add>, %164, %cst_54 [1] : vector<16x32xf32> to vector<16xf32>
    %168 = vector.shape_cast %167 : vector<16xf32> to vector<16x1xf32>
    %cst_55 = arith.constant 3.200000e+01 : f32
    %169 = vector.broadcast %cst_55 : f32 to vector<16x1xf32>
    %170 = arith.divf %168, %169 : vector<16x1xf32>
    %171 = vector.broadcast %170 : vector<16x1xf32> to vector<16x32xf32>
    %172 = arith.subf %164, %171 : vector<16x32xf32>
    %173 = arith.mulf %172, %172 : vector<16x32xf32>
    %cst_56 = arith.constant dense<0.000000e+00> : vector<16xf32>
    %174 = vector.multi_reduction <add>, %173, %cst_56 [1] : vector<16x32xf32> to vector<16xf32>
    %175 = vector.shape_cast %174 : vector<16xf32> to vector<16x1xf32>
    %cst_57 = arith.constant 3.200000e+01 : f32
    %176 = vector.broadcast %cst_57 : f32 to vector<16x1xf32>
    %177 = arith.divf %175, %176 : vector<16x1xf32>
    %178 = vector.broadcast %170 : vector<16x1xf32> to vector<16x32xf32>
    %179 = arith.subf %164, %178 : vector<16x32xf32>
    %cst_58 = arith.constant 9.99999996E-13 : f32
    %180 = vector.broadcast %cst_58 : f32 to vector<16x1xf32>
    %181 = arith.addf %177, %180 : vector<16x1xf32>
    %182 = math.rsqrt %181 : vector<16x1xf32>
    %183 = vector.broadcast %182 : vector<16x1xf32> to vector<16x32xf32>
    %184 = arith.mulf %179, %183 : vector<16x32xf32>
    %185 = vector.broadcast %165 : vector<1x32xf32> to vector<16x32xf32>
    %186 = arith.mulf %184, %185 : vector<16x32xf32>
    %187 = vector.broadcast %166 : vector<1x32xf32> to vector<16x32xf32>
    %188 = arith.addf %186, %187 : vector<16x32xf32>
    %c32 = arith.constant 32 : index
    %c0_59 = arith.constant 0 : index
    %189 = vector.load %arg2[%c32, %c0_59] : memref<64x96xf32, #tpu.memory_space<vmem>>, vector<32x96xf32>
    %190 = arith.truncf %188 : vector<16x32xf32> to vector<16x32xbf16>
    %191 = arith.truncf %189 : vector<32x96xf32> to vector<32x96xbf16>
    %cst_60 = arith.constant dense<0.000000e+00> : vector<16x96xf32>
    %192 = tpu.matmul %190, %191, %cst_60 {dimension_numbers = #tpu.dot_dimension_numbers<[1], [0], [0], [1], [0, 0, 1, 1], [], []>} : vector<16x32xbf16>, vector<32x96xbf16>, vector<16x96xf32> -> vector<16x96xf32>
    %193 = vector.extract_strided_slice %192 {offsets = [0, 0], sizes = [16, 32], strides = [1, 1]} : vector<16x96xf32> to vector<16x32xf32>
    %c420 = arith.constant 420 : index
    %c0_61 = arith.constant 0 : index
    %194 = vector.load %arg1[%c420, %c0_61] : memref<432x32xf32, #tpu.memory_space<vmem>>, vector<1x32xf32>
    %195 = vector.broadcast %194 : vector<1x32xf32> to vector<16x32xf32>
    %196 = arith.addf %193, %195 : vector<16x32xf32>
    %197 = vector.shape_cast %196 : vector<16x32xf32> to vector<2x8x32xf32>
    %198 = vector.extract_strided_slice %192 {offsets = [0, 32], sizes = [16, 32], strides = [1, 1]} : vector<16x96xf32> to vector<16x32xf32>
    %c421 = arith.constant 421 : index
    %c0_62 = arith.constant 0 : index
    %199 = vector.load %arg1[%c421, %c0_62] : memref<432x32xf32, #tpu.memory_space<vmem>>, vector<1x32xf32>
    %200 = vector.broadcast %199 : vector<1x32xf32> to vector<16x32xf32>
    %201 = arith.addf %198, %200 : vector<16x32xf32>
    %202 = vector.shape_cast %201 : vector<16x32xf32> to vector<2x8x32xf32>
    %203 = vector.extract_strided_slice %192 {offsets = [0, 64], sizes = [16, 32], strides = [1, 1]} : vector<16x96xf32> to vector<16x32xf32>
    %c422 = arith.constant 422 : index
    %c0_63 = arith.constant 0 : index
    %204 = vector.load %arg1[%c422, %c0_63] : memref<432x32xf32, #tpu.memory_space<vmem>>, vector<1x32xf32>
    %205 = vector.broadcast %204 : vector<1x32xf32> to vector<16x32xf32>
    %206 = arith.addf %203, %205 : vector<16x32xf32>
    %207 = vector.shape_cast %206 : vector<16x32xf32> to vector<2x8x32xf32>
    %cst_64 = arith.constant 0.000000e+00 : f32
    %208 = vector.broadcast %cst_64 : f32 to vector<16x32xf32>
    %209 = vector.extract_strided_slice %197 {offsets = [0, 0, 0], sizes = [2, 8, 16], strides = [1, 1, 1]} : vector<2x8x32xf32> to vector<2x8x16xf32>
    %210 = vector.extract_strided_slice %202 {offsets = [0, 0, 0], sizes = [2, 8, 16], strides = [1, 1, 1]} : vector<2x8x32xf32> to vector<2x8x16xf32>
    %211 = vector.extract_strided_slice %207 {offsets = [0, 0, 0], sizes = [2, 8, 16], strides = [1, 1, 1]} : vector<2x8x32xf32> to vector<2x8x16xf32>
    "tpu.trace_start"() <{level = 10 : i32, message = "bqd,bkd->bqk"}> : () -> ()
    %cst_65 = arith.constant dense<0.000000e+00> : vector<2x8x8xf32>
    %212 = tpu.matmul %209, %210, %cst_65 {dimension_numbers = #tpu.dot_dimension_numbers<[2], [2], [1], [1], [0, 0, 0, 1, 1, 1], [0], [0]>} : vector<2x8x16xf32>, vector<2x8x16xf32>, vector<2x8x8xf32> -> vector<2x8x8xf32>
    "tpu.trace_stop"() : () -> ()
    %cst_66 = arith.constant 2.500000e-01 : f32
    %213 = vector.broadcast %cst_66 : f32 to vector<2x8x8xf32>
    %214 = arith.mulf %212, %213 : vector<2x8x8xf32>
    %215 = math.exp %214 : vector<2x8x8xf32>
    %216 = vector.broadcast %22 : vector<1x1x8xf32> to vector<2x8x8xf32>
    %217 = arith.mulf %215, %216 : vector<2x8x8xf32>
    %cst_67 = arith.constant dense<0.000000e+00> : vector<2x8xf32>
    %218 = vector.multi_reduction <add>, %217, %cst_67 [2] : vector<2x8x8xf32> to vector<2x8xf32>
    %219 = vector.shape_cast %218 : vector<2x8xf32> to vector<2x8x1xf32>
    %220 = tpu.reciprocal %219 {approx = true} : vector<2x8x1xf32> -> vector<2x8x1xf32>
    %221 = vector.broadcast %220 : vector<2x8x1xf32> to vector<2x8x8xf32>
    %222 = arith.mulf %217, %221 : vector<2x8x8xf32>
    "tpu.trace_start"() <{level = 10 : i32, message = "bqk,bkd->bqd"}> : () -> ()
    %cst_68 = arith.constant dense<0.000000e+00> : vector<2x8x16xf32>
    %223 = tpu.matmul %222, %211, %cst_68 {dimension_numbers = #tpu.dot_dimension_numbers<[2], [1], [1], [2], [0, 0, 0, 1, 1, 2], [0], [0]>} : vector<2x8x8xf32>, vector<2x8x16xf32>, vector<2x8x16xf32> -> vector<2x8x16xf32>
    "tpu.trace_stop"() : () -> ()
    %224 = vector.shape_cast %223 : vector<2x8x16xf32> to vector<16x16xf32>
    %c320 = arith.constant 320 : index
    %c0_69 = arith.constant 0 : index
    %225 = vector.load %arg1[%c320, %c0_69] : memref<432x32xf32, #tpu.memory_space<vmem>>, vector<16x32xf32>
    %226 = arith.truncf %224 : vector<16x16xf32> to vector<16x16xbf16>
    %227 = arith.truncf %225 : vector<16x32xf32> to vector<16x32xbf16>
    %cst_70 = arith.constant dense<0.000000e+00> : vector<16x32xf32>
    %228 = tpu.matmul %226, %227, %cst_70 {dimension_numbers = #tpu.dot_dimension_numbers<[1], [0], [0], [1], [0, 0, 1, 1], [], []>} : vector<16x16xbf16>, vector<16x32xbf16>, vector<16x32xf32> -> vector<16x32xf32>
    %229 = arith.addf %208, %228 : vector<16x32xf32>
    %230 = vector.extract_strided_slice %197 {offsets = [0, 0, 16], sizes = [2, 8, 16], strides = [1, 1, 1]} : vector<2x8x32xf32> to vector<2x8x16xf32>
    %231 = vector.extract_strided_slice %202 {offsets = [0, 0, 16], sizes = [2, 8, 16], strides = [1, 1, 1]} : vector<2x8x32xf32> to vector<2x8x16xf32>
    %232 = vector.extract_strided_slice %207 {offsets = [0, 0, 16], sizes = [2, 8, 16], strides = [1, 1, 1]} : vector<2x8x32xf32> to vector<2x8x16xf32>
    "tpu.trace_start"() <{level = 10 : i32, message = "bqd,bkd->bqk"}> : () -> ()
    %cst_71 = arith.constant dense<0.000000e+00> : vector<2x8x8xf32>
    %233 = tpu.matmul %230, %231, %cst_71 {dimension_numbers = #tpu.dot_dimension_numbers<[2], [2], [1], [1], [0, 0, 0, 1, 1, 1], [0], [0]>} : vector<2x8x16xf32>, vector<2x8x16xf32>, vector<2x8x8xf32> -> vector<2x8x8xf32>
    "tpu.trace_stop"() : () -> ()
    %cst_72 = arith.constant 2.500000e-01 : f32
    %234 = vector.broadcast %cst_72 : f32 to vector<2x8x8xf32>
    %235 = arith.mulf %233, %234 : vector<2x8x8xf32>
    %236 = math.exp %235 : vector<2x8x8xf32>
    %237 = vector.broadcast %22 : vector<1x1x8xf32> to vector<2x8x8xf32>
    %238 = arith.mulf %236, %237 : vector<2x8x8xf32>
    %cst_73 = arith.constant dense<0.000000e+00> : vector<2x8xf32>
    %239 = vector.multi_reduction <add>, %238, %cst_73 [2] : vector<2x8x8xf32> to vector<2x8xf32>
    %240 = vector.shape_cast %239 : vector<2x8xf32> to vector<2x8x1xf32>
    %241 = tpu.reciprocal %240 {approx = true} : vector<2x8x1xf32> -> vector<2x8x1xf32>
    %242 = vector.broadcast %241 : vector<2x8x1xf32> to vector<2x8x8xf32>
    %243 = arith.mulf %238, %242 : vector<2x8x8xf32>
    "tpu.trace_start"() <{level = 10 : i32, message = "bqk,bkd->bqd"}> : () -> ()
    %cst_74 = arith.constant dense<0.000000e+00> : vector<2x8x16xf32>
    %244 = tpu.matmul %243, %232, %cst_74 {dimension_numbers = #tpu.dot_dimension_numbers<[2], [1], [1], [2], [0, 0, 0, 1, 1, 2], [0], [0]>} : vector<2x8x8xf32>, vector<2x8x16xf32>, vector<2x8x16xf32> -> vector<2x8x16xf32>
    "tpu.trace_stop"() : () -> ()
    %245 = vector.shape_cast %244 : vector<2x8x16xf32> to vector<16x16xf32>
    %c336 = arith.constant 336 : index
    %c0_75 = arith.constant 0 : index
    %246 = vector.load %arg1[%c336, %c0_75] : memref<432x32xf32, #tpu.memory_space<vmem>>, vector<16x32xf32>
    %247 = arith.truncf %245 : vector<16x16xf32> to vector<16x16xbf16>
    %248 = arith.truncf %246 : vector<16x32xf32> to vector<16x32xbf16>
    %cst_76 = arith.constant dense<0.000000e+00> : vector<16x32xf32>
    %249 = tpu.matmul %247, %248, %cst_76 {dimension_numbers = #tpu.dot_dimension_numbers<[1], [0], [0], [1], [0, 0, 1, 1], [], []>} : vector<16x16xbf16>, vector<16x32xbf16>, vector<16x32xf32> -> vector<16x32xf32>
    %250 = arith.addf %229, %249 : vector<16x32xf32>
    %251 = arith.addf %164, %250 : vector<16x32xf32>
    %c423 = arith.constant 423 : index
    %c0_77 = arith.constant 0 : index
    %252 = vector.load %arg1[%c423, %c0_77] : memref<432x32xf32, #tpu.memory_space<vmem>>, vector<1x32xf32>
    %253 = vector.broadcast %252 : vector<1x32xf32> to vector<16x32xf32>
    %254 = arith.addf %251, %253 : vector<16x32xf32>
    %c418 = arith.constant 418 : index
    %c0_78 = arith.constant 0 : index
    %255 = vector.load %arg1[%c418, %c0_78] : memref<432x32xf32, #tpu.memory_space<vmem>>, vector<1x32xf32>
    %c419 = arith.constant 419 : index
    %c0_79 = arith.constant 0 : index
    %256 = vector.load %arg1[%c419, %c0_79] : memref<432x32xf32, #tpu.memory_space<vmem>>, vector<1x32xf32>
    %cst_80 = arith.constant dense<0.000000e+00> : vector<16xf32>
    %257 = vector.multi_reduction <add>, %254, %cst_80 [1] : vector<16x32xf32> to vector<16xf32>
    %258 = vector.shape_cast %257 : vector<16xf32> to vector<16x1xf32>
    %cst_81 = arith.constant 3.200000e+01 : f32
    %259 = vector.broadcast %cst_81 : f32 to vector<16x1xf32>
    %260 = arith.divf %258, %259 : vector<16x1xf32>
    %261 = vector.broadcast %260 : vector<16x1xf32> to vector<16x32xf32>
    %262 = arith.subf %254, %261 : vector<16x32xf32>
    %263 = arith.mulf %262, %262 : vector<16x32xf32>
    %cst_82 = arith.constant dense<0.000000e+00> : vector<16xf32>
    %264 = vector.multi_reduction <add>, %263, %cst_82 [1] : vector<16x32xf32> to vector<16xf32>
    %265 = vector.shape_cast %264 : vector<16xf32> to vector<16x1xf32>
    %cst_83 = arith.constant 3.200000e+01 : f32
    %266 = vector.broadcast %cst_83 : f32 to vector<16x1xf32>
    %267 = arith.divf %265, %266 : vector<16x1xf32>
    %268 = vector.broadcast %260 : vector<16x1xf32> to vector<16x32xf32>
    %269 = arith.subf %254, %268 : vector<16x32xf32>
    %cst_84 = arith.constant 9.99999996E-13 : f32
    %270 = vector.broadcast %cst_84 : f32 to vector<16x1xf32>
    %271 = arith.addf %267, %270 : vector<16x1xf32>
    %272 = math.rsqrt %271 : vector<16x1xf32>
    %273 = vector.broadcast %272 : vector<16x1xf32> to vector<16x32xf32>
    %274 = arith.mulf %269, %273 : vector<16x32xf32>
    %275 = vector.broadcast %255 : vector<1x32xf32> to vector<16x32xf32>
    %276 = arith.mulf %274, %275 : vector<16x32xf32>
    %277 = vector.broadcast %256 : vector<1x32xf32> to vector<16x32xf32>
    %278 = arith.addf %276, %277 : vector<16x32xf32>
    %c32_85 = arith.constant 32 : index
    %c0_86 = arith.constant 0 : index
    %279 = vector.load %arg3[%c32_85, %c0_86] : memref<72x64xf32, #tpu.memory_space<vmem>>, vector<32x64xf32>
    %c65 = arith.constant 65 : index
    %c0_87 = arith.constant 0 : index
    %280 = vector.load %arg3[%c65, %c0_87] : memref<72x64xf32, #tpu.memory_space<vmem>>, vector<1x64xf32>
    %281 = arith.truncf %278 : vector<16x32xf32> to vector<16x32xbf16>
    %282 = arith.truncf %279 : vector<32x64xf32> to vector<32x64xbf16>
    %cst_88 = arith.constant dense<0.000000e+00> : vector<16x64xf32>
    %283 = tpu.matmul %281, %282, %cst_88 {dimension_numbers = #tpu.dot_dimension_numbers<[1], [0], [0], [1], [0, 0, 1, 1], [], []>} : vector<16x32xbf16>, vector<32x64xbf16>, vector<16x64xf32> -> vector<16x64xf32>
    %284 = vector.broadcast %280 : vector<1x64xf32> to vector<16x64xf32>
    %285 = arith.addf %283, %284 : vector<16x64xf32>
    %286 = arith.mulf %285, %285 : vector<16x64xf32>
    %287 = arith.mulf %285, %286 : vector<16x64xf32>
    %cst_89 = arith.constant 4.471500e-02 : f32
    %288 = vector.broadcast %cst_89 : f32 to vector<16x64xf32>
    %289 = arith.mulf %288, %287 : vector<16x64xf32>
    %290 = arith.addf %285, %289 : vector<16x64xf32>
    %cst_90 = arith.constant 0.797884583 : f32
    %291 = vector.broadcast %cst_90 : f32 to vector<16x64xf32>
    %292 = arith.mulf %291, %290 : vector<16x64xf32>
    %293 = math.tanh %292 : vector<16x64xf32>
    %cst_91 = arith.constant 1.000000e+00 : f32
    %294 = vector.broadcast %cst_91 : f32 to vector<16x64xf32>
    %295 = arith.addf %294, %293 : vector<16x64xf32>
    %cst_92 = arith.constant 5.000000e-01 : f32
    %296 = vector.broadcast %cst_92 : f32 to vector<16x64xf32>
    %297 = arith.mulf %296, %295 : vector<16x64xf32>
    %298 = arith.mulf %285, %297 : vector<16x64xf32>
    %c352 = arith.constant 352 : index
    %c0_93 = arith.constant 0 : index
    %299 = vector.load %arg1[%c352, %c0_93] : memref<432x32xf32, #tpu.memory_space<vmem>>, vector<64x32xf32>
    %300 = arith.truncf %298 : vector<16x64xf32> to vector<16x64xbf16>
    %301 = arith.truncf %299 : vector<64x32xf32> to vector<64x32xbf16>
    %cst_94 = arith.constant dense<0.000000e+00> : vector<16x32xf32>
    %302 = tpu.matmul %300, %301, %cst_94 {dimension_numbers = #tpu.dot_dimension_numbers<[1], [0], [0], [1], [0, 0, 1, 1], [], []>} : vector<16x64xbf16>, vector<64x32xbf16>, vector<16x32xf32> -> vector<16x32xf32>
    %c424 = arith.constant 424 : index
    %c0_95 = arith.constant 0 : index
    %303 = vector.load %arg1[%c424, %c0_95] : memref<432x32xf32, #tpu.memory_space<vmem>>, vector<1x32xf32>
    %304 = vector.broadcast %303 : vector<1x32xf32> to vector<16x32xf32>
    %305 = arith.addf %302, %304 : vector<16x32xf32>
    %306 = arith.addf %254, %305 : vector<16x32xf32>
    %307 = vector.extract_strided_slice %306 {offsets = [0, 0], sizes = [1, 32], strides = [1, 1]} : vector<16x32xf32> to vector<1x32xf32>
    %308 = vector.extract_strided_slice %306 {offsets = [8, 0], sizes = [1, 32], strides = [1, 1]} : vector<16x32xf32> to vector<1x32xf32>
    %309 = tpu.concatenate %307, %308 in 0 : vector<1x32xf32>, vector<1x32xf32> -> vector<2x32xf32>
    %c202 = arith.constant 202 : index
    %c0_96 = arith.constant 0 : index
    %310 = vector.load %arg1[%c202, %c0_96] : memref<432x32xf32, #tpu.memory_space<vmem>>, vector<1x32xf32>
    %c203 = arith.constant 203 : index
    %c0_97 = arith.constant 0 : index
    %311 = vector.load %arg1[%c203, %c0_97] : memref<432x32xf32, #tpu.memory_space<vmem>>, vector<1x32xf32>
    %cst_98 = arith.constant dense<0.000000e+00> : vector<2xf32>
    %312 = vector.multi_reduction <add>, %309, %cst_98 [1] : vector<2x32xf32> to vector<2xf32>
    %313 = vector.shape_cast %312 : vector<2xf32> to vector<2x1xf32>
    %cst_99 = arith.constant 3.200000e+01 : f32
    %314 = vector.broadcast %cst_99 : f32 to vector<2x1xf32>
    %315 = arith.divf %313, %314 : vector<2x1xf32>
    %316 = vector.broadcast %315 : vector<2x1xf32> to vector<2x32xf32>
    %317 = arith.subf %309, %316 : vector<2x32xf32>
    %318 = arith.mulf %317, %317 : vector<2x32xf32>
    %cst_100 = arith.constant dense<0.000000e+00> : vector<2xf32>
    %319 = vector.multi_reduction <add>, %318, %cst_100 [1] : vector<2x32xf32> to vector<2xf32>
    %320 = vector.shape_cast %319 : vector<2xf32> to vector<2x1xf32>
    %cst_101 = arith.constant 3.200000e+01 : f32
    %321 = vector.broadcast %cst_101 : f32 to vector<2x1xf32>
    %322 = arith.divf %320, %321 : vector<2x1xf32>
    %323 = vector.broadcast %315 : vector<2x1xf32> to vector<2x32xf32>
    %324 = arith.subf %309, %323 : vector<2x32xf32>
    %cst_102 = arith.constant 9.99999996E-13 : f32
    %325 = vector.broadcast %cst_102 : f32 to vector<2x1xf32>
    %326 = arith.addf %322, %325 : vector<2x1xf32>
    %327 = math.rsqrt %326 : vector<2x1xf32>
    %328 = vector.broadcast %327 : vector<2x1xf32> to vector<2x32xf32>
    %329 = arith.mulf %324, %328 : vector<2x32xf32>
    %330 = vector.broadcast %310 : vector<1x32xf32> to vector<2x32xf32>
    %331 = arith.mulf %329, %330 : vector<2x32xf32>
    %332 = vector.broadcast %311 : vector<1x32xf32> to vector<2x32xf32>
    %333 = arith.addf %331, %332 : vector<2x32xf32>
    %cst_103 = arith.constant 0.000000e+00 : f32
    %334 = vector.broadcast %cst_103 : f32 to vector<2x96xf32>
    %335 = tpu.concatenate %333, %334 in 1 : vector<2x32xf32>, vector<2x96xf32> -> vector<2x128xf32>
    %cst_104 = arith.constant 0.000000e+00 : f32
    %336 = vector.broadcast %cst_104 : f32 to vector<6x128xf32>
    %337 = tpu.concatenate %335, %336 in 0 : vector<2x128xf32>, vector<6x128xf32> -> vector<8x128xf32>
    %c0_105 = arith.constant 0 : index
    %c0_106 = arith.constant 0 : index
    %338 = vector.load %arg4[%c0_105, %c0_106] : memref<8x128xf32, #tpu.memory_space<vmem>>, vector<8x128xf32>
    tpu.vector_store %arg4[%c0_105, %c0_106], %337 {strides = array<i32>} : memref<8x128xf32, #tpu.memory_space<vmem>>, vector<8x128xf32>,
    %c204 = arith.constant 204 : index
    %c0_107 = arith.constant 0 : index
    %339 = vector.load %arg1[%c204, %c0_107] : memref<432x32xf32, #tpu.memory_space<vmem>>, vector<1x32xf32>
    %340 = vector.broadcast %339 : vector<1x32xf32> to vector<2x32xf32>
    %341 = arith.mulf %333, %340 : vector<2x32xf32>
    %cst_108 = arith.constant dense<0.000000e+00> : vector<2xf32>
    %342 = vector.multi_reduction <add>, %341, %cst_108 [1] : vector<2x32xf32> to vector<2xf32>
    %343 = vector.shape_cast %342 : vector<2xf32> to vector<2x1xf32>
    %c205 = arith.constant 205 : index
    %c0_109 = arith.constant 0 : index
    %344 = vector.load %arg1[%c205, %c0_109] : memref<432x32xf32, #tpu.memory_space<vmem>>, vector<1x32xf32>
    %345 = vector.extract_strided_slice %344 {offsets = [0, 0], sizes = [1, 1], strides = [1, 1]} : vector<1x32xf32> to vector<1x1xf32>
    %346 = vector.broadcast %345 : vector<1x1xf32> to vector<2x1xf32>
    %347 = arith.addf %343, %346 : vector<2x1xf32>
    %cst_110 = arith.constant -1.000000e+00 : f32
    %348 = vector.broadcast %cst_110 : f32 to vector<6x1xf32>
    %349 = tpu.concatenate %347, %348 in 0 : vector<2x1xf32>, vector<6x1xf32> -> vector<8x1xf32>
    %350 = vector.shape_cast %349 : vector<8x1xf32> to vector<8x1xf32>
    %351 = vector.broadcast %350 : vector<8x1xf32> to vector<8x128xf32>
    %cst_111 = arith.constant 0.000000e+00 : f32
    %352 = vector.broadcast %cst_111 : f32 to vector<8x128xf32>
    %353 = arith.cmpf ogt, %351, %352 : vector<8x128xf32>
    %c1_i32 = arith.constant 1 : i32
    %c0_i32 = arith.constant 0 : i32
    %354 = vector.broadcast %c1_i32 : i32 to vector<8x128xi32>
    %355 = vector.broadcast %c0_i32 : i32 to vector<8x128xi32>
    %356 = arith.select %353, %354, %355 : vector<8x128xi1>, vector<8x128xi32>
    %c0_112 = arith.constant 0 : index
    %c0_113 = arith.constant 0 : index
    %357 = vector.load %arg5[%c0_112, %c0_113] : memref<8x128xi32, #tpu.memory_space<vmem>>, vector<8x128xi32>
    tpu.vector_store %arg5[%c0_112, %c0_113], %356 {strides = array<i32>} : memref<8x128xi32, #tpu.memory_space<vmem>>, vector<8x128xi32>,
    return
  }
}

</mosaic_0001>

<llo_original>
// kernel: vit_contrastive_forward.1
$region0: #{vit_contrastive_forward.1}
  #allocation0 [shape = 'u32[]', space=smem, size = 0x4, offset = 0x4, fixed_abs, tag = 'smem constant byte address 0x4 - core index']
  #allocation1 [shape = 'u32[144,128]{1,0:T(1,128)}', space=vmem, size = 0x12000, scoped, tag = 'internal scratch']
  %s0 = inlined_call_operand.vmem [shape: f32[8,192], index: 0, kind: input, shape index: {}]
  %s1 = inlined_call_operand.vmem [shape: f32[432,32], index: 1, kind: input, shape index: {}]
  %s2 = inlined_call_operand.vmem [shape: f32[64,96], index: 2, kind: input, shape index: {}]
  %s3 = inlined_call_operand.vmem [shape: f32[72,64], index: 3, kind: input, shape index: {}]
  %s4 = inlined_call_operand.vmem [shape: f32[8,128], index: 4, kind: output, shape index: {0}]
  %s5 = inlined_call_operand.hbm [shape: s32[8,128], index: 5, kind: output, shape index: {1}]
  %6 = xla_tuple %s4, %s5
  %s7 = sld [smem:[#allocation0]]
  $region34: #{vit_contrastive_forward.1} parent=0
    _
  %s9 = ssub.s32 1, %s7
  %s10 = scalar_select 0, %s9, %s7
  $region1: #{vit_contrastive_forward.1} parent=0
    #allocation2 [shape = 'u8[4096]{0}', space=vmem, size = 0x1000, scoped, tag = 'output window, operand 1, single buffered']
    #allocation3 [shape = 's32[1]{0}', space=sflag, size = 0x4, scoped, tag = 'scoped memory for vit_contrastive_forward.1']
    %11 = vsyncpa [#allocation3], 0
    // Predicated region
    $region2: #{vit_contrastive_forward.1} parent=1 // pred_check
      _
    $region3: #{vit_contrastive_forward.1} parent=1 // pred_check_branch
      %13 = sbr.rel (0) target = $region5
    $region4: #{vit_contrastive_forward.1} parent=1 // pred_region
      _
    $region5: #{vit_contrastive_forward.1} parent=1 // pred_fallthru
      _
    // Predicated region
    $region6: #{vit_contrastive_forward.1} parent=1 // pred_check
      _
    $region7: #{vit_contrastive_forward.1} parent=1 // pred_check_branch
      %15 = sbr.rel (0) target = $region9
    $region8: #{vit_contrastive_forward.1} parent=1 // pred_region
      _
    $region9: #{vit_contrastive_forward.1} parent=1 // pred_fallthru
      _
    // Predicated region
    $region10: #{vit_contrastive_forward.1} parent=1 // pred_check
      _
    $region11: #{vit_contrastive_forward.1} parent=1 // pred_check_branch
      %17 = sbr.rel (0) target = $region13
    $region12: #{vit_contrastive_forward.1} parent=1 // pred_region
      _
    $region13: #{vit_contrastive_forward.1} parent=1 // pred_fallthru
      _
    // Predicated region
    $region14: #{vit_contrastive_forward.1} parent=1 // pred_check
      _
    $region15: #{vit_contrastive_forward.1} parent=1 // pred_check_branch
      %19 = sbr.rel (0) target = $region17
    $region16: #{vit_contrastive_forward.1} parent=1 // pred_region
      _
    $region17: #{vit_contrastive_forward.1} parent=1 // pred_fallthru
      _
    %v21 = vld [vmem:[%s1] sm:$0xff]
    %v22 = vld [vmem:[%s1 + $0x8] sm:$0xff]
    %v23 = vld [vmem:[%s1 + $0x10] sm:$0xff]
    %v24 = vld [vmem:[%s1 + $0x18] sm:$0xff]
    %v25 = vld [vmem:[%s1 + $0x20] sm:$0xff]
    %v26 = vld [vmem:[%s1 + $0x28] sm:$0xff]
    %v27 = vld [vmem:[%s1 + $0x30] sm:$0xff]
    %v28 = vld [vmem:[%s1 + $0x38] sm:$0xff]
    %v29 = vld [vmem:[%s1 + $0x40] sm:$0xff]
    %v30 = vld [vmem:[%s1 + $0x48] sm:$0xff]
    %v31 = vld [vmem:[%s1 + $0x50] sm:$0xff]
    %v32 = vld [vmem:[%s1 + $0x58] sm:$0xff]
    %v33 = vld [vmem:[%s1 + $0x60] sm:$0xff]
    %v34 = vld [vmem:[%s1 + $0x68] sm:$0xff]
    %v35 = vld [vmem:[%s1 + $0x70] sm:$0xff]
    %v36 = vld [vmem:[%s1 + $0x78] sm:$0xff]
    %v37 = vld [vmem:[%s1 + $0x80] sm:$0xff]
    %v38 = vld [vmem:[%s1 + $0x88] sm:$0xff]
    %v39 = vld [vmem:[%s1 + $0x90] sm:$0xff]
    %v40 = vld [vmem:[%s1 + $0x98] sm:$0xff]
    %v41 = vld [vmem:[%s1 + $0xa0] sm:$0xff]
    %v42 = vld [vmem:[%s1 + $0xa8] sm:$0xff]
    %v43 = vld [vmem:[%s1 + $0xb0] sm:$0xff]
    %v44 = vld [vmem:[%s1 + $0xb8] sm:$0xff]
    %v45 = vld [vmem:[%s0] sm:$0xff]
    %v46 = vld [vmem:[%s0 + $0x8] sm:$0xff]
    %v47 = vpack.c.bf16 %v45, %v45
    %v48 = vpack.c.bf16 %v46, %v46
    %v49 = vpack.c.bf16 %v22, %v21
    %v50 = vpack.c.bf16 %v24, %v23
    %v51 = vpack.c.bf16 %v26, %v25
    %v52 = vpack.c.bf16 %v28, %v27
    %v53 = vpack.c.bf16 %v30, %v29
    %v54 = vpack.c.bf16 %v32, %v31
    %v55 = vpack.c.bf16 %v34, %v33
    %v56 = vpack.c.bf16 %v36, %v35
    %v57 = vpack.c.bf16 %v38, %v37
    %v58 = vpack.c.bf16 %v40, %v39
    %v59 = vpack.c.bf16 %v42, %v41
    %v60 = vpack.c.bf16 %v44, %v43
    %v61 = vld [vmem:[%s1 + $0xc8] sm:$0x1]
    %v62 = vlaneseq
    %v63 = vshrl.u32 %v62, 7
    %v64 = vsub.s32 0, %v63
    %v65 = vrot.slane %v61, %v64
    %vm66 = vcmask 523264
    %v68 = vsel %vm66, %v48, 0
    %70 = vmatprep.subr.bf16.mxu0 0
    %71 = vmatpush1.bf16.msra.mxu0 %v56
    %72 = vmatprep.subr.bf16.mxu0 0
    %73 = vmatpush1.bf16.msra.mxu0 %v55
    %74 = vmatprep.subr.bf16.mxu0 0
    %75 = vmatpush1.bf16.msra.mxu0 %v54
    %76 = vmatprep.subr.bf16.mxu0 0
    %77 = vmatpush1.bf16.msra.mxu0 %v53
    %78 = vmatprep.subr.bf16.mxu0 0
    %79 = vmatpush1.bf16.msra.mxu0 %v52
    %80 = vmatprep.subr.bf16.mxu0 0
    %81 = vmatpush1.bf16.msra.mxu0 %v51
    %82 = vmatprep.subr.bf16.mxu0 0
    %83 = vmatpush1.bf16.msra.mxu0 %v50
    %84 = vmatprep.subr.bf16.mxu0 0
    %85 = vmatpush1.bf16.msra.mxu0 %v49
    %86 = vmatprep.subr.bf16.mxu0 0
    %87 = vmatpush2.bf16.msra.mxu0 0
    %88 = vmatprep.subr.bf16.mxu0 0
    %89 = vmatpush2.bf16.msra.mxu0 0
    %90 = vmatprep.subr.bf16.mxu0 0
    %91 = vmatpush2.bf16.msra.mxu0 0
    %92 = vmatprep.subr.bf16.mxu0 0
    %93 = vmatpush2.bf16.msra.mxu0 0
    %94 = vmatprep.subr.bf16.mxu0 0
    %95 = vmatpush2.bf16.msra.mxu0 %v60
    %96 = vmatprep.subr.bf16.mxu0 0
    %97 = vmatpush2.bf16.msra.mxu0 %v59
    %98 = vmatprep.subr.bf16.mxu0 0
    %99 = vmatpush2.bf16.msra.mxu0 %v58
    %100 = vmatprep.subr.bf16.mxu0 0
    %101 = vmatpush2.bf16.msra.mxu0 %v57
    %102 = vmatprep.mubr.bf16.mxu0 %v68
    %103 = vmatmul.mubr.bf16.gmra.mxu0 %v47
    %v104 = vpop.f32.mrf.mxu0
    %v105 = vadd.f32 %v65, %v104
    %v106 = vpop.f32.mrf.mxu0
    %v107 = vpop.f32.mrf.mxu0
    %v108 = vpop.f32.mrf.mxu0
    %109 = vdwg.mxu0
    %v110 = vld [vmem:[%s1 + $0xc0] sm:$0xff]
    %v111 = vld [vmem:[%s1 + $0xc9] sm:$0x1]
    %v113 = vrot.slane %v105, 7
    %vm115 = vcmask 1040384
    %v116 = vsel %vm115, %v111, %v113
    %vm117 = vcmask 1044480
    %v118 = vsel %vm117, %v116, 0.0
    %v119 = vadd.f32 %v118, %v110
    %v120 = vrot.slane %v105, 3
    %v122 = vsel %vm115, %v111, %v120
    %v123 = vsel %vm117, %v122, 0.0
    %v124 = vadd.f32 %v123, %v110
    %v125 = vlaneseq
    %v126 = vand.u32 %v125, 127
    %vm127 = vcmp.lt.s32.totalorder %v126, 5
    %v128 = vsel %vm127, 1, 0
    %v129 = vcvt.s32.f32 %v128
    %v130 = vld [vmem:[%s1 + $0x130] sm:$0x1]
    %v131 = vld [vmem:[%s1 + $0x131] sm:$0x1]
    %vm132 = vcmask 261120
    %v133 = vsel %vm132, %v119, 0.0
    %134 = vadd.xlane.f32.xlu0 %v133
    %v135 = vpop.xlane.xlu0 %134
    %v136 = vsel %vm132, %v124, 0.0
    %137 = vadd.xlane.f32.xlu0 %v136
    %v138 = vpop.xlane.xlu0 %137
    %v139 = vrcp.pop 32.0
    %v140 = vmul.f32 %v135, %v139
    %v141 = vmul.f32 %v138, %v139
    %v142 = vsub.f32 %v119, %v140
    %v143 = vsub.f32 %v124, %v141
    %v144 = vmul.f32 %v142, %v142
    %v145 = vmul.f32 %v143, %v143
    %v146 = vsel %vm132, %v144, 0.0
    %147 = vadd.xlane.f32.xlu0 %v146
    %v148 = vpop.xlane.xlu0 %147
    %v149 = vsel %vm132, %v145, 0.0
    %150 = vadd.xlane.f32.xlu0 %v149
    %v151 = vpop.xlane.xlu0 %150
    %v152 = vmul.f32 %v148, %v139
    %v153 = vmul.f32 %v151, %v139
    %v154 = vadd.f32 %v152, 1e-12
    %v155 = vadd.f32 %v153, 1e-12
    %v156 = vrsqrt.pop %v154
    %v157 = vrsqrt.pop %v155
    %v158 = vmul.f32 %v142, %v156
    %v159 = vmul.f32 %v143, %v157
    %v160 = vlaneseq
    %v161 = vshrl.u32 %v160, 7
    %v162 = vsub.s32 0, %v161
    %v163 = vrot.slane %v130, %v162
    %v164 = vmul.f32 %v158, %v163
    %v165 = vmul.f32 %v159, %v163
    %v166 = vlaneseq
    %v167 = vshrl.u32 %v166, 7
    %v168 = vsub.s32 0, %v167
    %v169 = vrot.slane %v131, %v168
    %v170 = vadd.f32 %v164, %v169
    %v171 = vadd.f32 %v165, %v169
    %v172 = vld [vmem:[%s2] sm:$0xff]
    %v173 = vld [vmem:[%s2 + $0x8] sm:$0xff]
    %v174 = vld [vmem:[%s2 + $0x10] sm:$0xff]
    %v175 = vld [vmem:[%s2 + $0x18] sm:$0xff]
    %v176 = vpack.c.bf16 %v171, %v170
    %v177 = vpack.c.bf16 %v173, %v172
    %v178 = vpack.c.bf16 %v175, %v174
    %v180 = vsel %vm132, %v176, 0
    %182 = vmatprep.subr.bf16.mxu0 0
    %183 = vmatpush1.bf16.msra.mxu0 0
    %184 = vmatprep.subr.bf16.mxu0 0
    %185 = vmatpush1.bf16.msra.mxu0 0
    %186 = vmatprep.subr.bf16.mxu0 0
    %187 = vmatpush1.bf16.msra.mxu0 0
    %188 = vmatprep.subr.bf16.mxu0 0
    %189 = vmatpush1.bf16.msra.mxu0 0
    %190 = vmatprep.subr.bf16.mxu0 0
    %191 = vmatpush1.bf16.msra.mxu0 0
    %192 = vmatprep.subr.bf16.mxu0 0
    %193 = vmatpush1.bf16.msra.mxu0 0
    %194 = vmatprep.subr.bf16.mxu0 0
    %195 = vmatpush1.bf16.msra.mxu0 %v178
    %196 = vmatprep.subr.bf16.mxu0 0
    %197 = vmatpush1.bf16.msra.mxu0 %v177
    %198 = vmatprep.subr.bf16.mxu0 0
    %199 = vmatpush2.bf16.msra.mxu0 0
    %200 = vmatprep.subr.bf16.mxu0 0
    %201 = vmatpush2.bf16.msra.mxu0 0
    %202 = vmatprep.subr.bf16.mxu0 0
    %203 = vmatpush2.bf16.msra.mxu0 0
    %204 = vmatprep.subr.bf16.mxu0 0
    %205 = vmatpush2.bf16.msra.mxu0 0
    %206 = vmatprep.subr.bf16.mxu0 0
    %207 = vmatpush2.bf16.msra.mxu0 0
    %208 = vmatprep.subr.bf16.mxu0 0
    %209 = vmatpush2.bf16.msra.mxu0 0
    %210 = vmatprep.subr.bf16.mxu0 0
    %211 = vmatpush2.bf16.msra.mxu0 0
    %212 = vmatprep.subr.bf16.mxu0 0
    %213 = vmatpush2.bf16.msra.mxu0 0
    %214 = vmatprep.mubr.bf16.mxu0 0
    %215 = vmatmul.mubr.bf16.gmra.mxu0 %v180
    %v216 = vpop.f32.mrf.mxu0
    %v217 = vadd.f32 0.0, %v216
    %v218 = vpop.f32.mrf.mxu0
    %v219 = vpop.f32.mrf.mxu0
    %v220 = vadd.f32 0.0, %v219
    %v221 = vpop.f32.mrf.mxu0
    %222 = vdwg.mxu0
    %v223 = vld [vmem:[%s1 + $0x134] sm:$0x1]
    %v224 = vlaneseq
    %v225 = vshrl.u32 %v224, 7
    %v226 = vsub.s32 0, %v225
    %v227 = vrot.slane %v223, %v226
    %v228 = vadd.f32 %v217, %v227
    %v229 = vadd.f32 %v220, %v227
    %v230 = vld [vmem:[%s1 + $0x135] sm:$0x1]
    %v231 = vlaneseq
    %v232 = vshrl.u32 %v231, 7
    %v233 = vsub.s32 0, %v232
    %v234 = vrot.slane %v230, %v233
    %236 = vrot.lane.b32.xlu0 %v234, 32
    %v237 = vpop.permute.xlu0 %236
    %v239 = vadd.f32 %v217, %v237
    %v240 = vadd.f32 %v220, %v237
    %v241 = vld [vmem:[%s1 + $0x136] sm:$0x1]
    %v242 = vlaneseq
    %v243 = vshrl.u32 %v242, 7
    %v244 = vsub.s32 0, %v243
    %v245 = vrot.slane %v241, %v244
    %247 = vrot.lane.b32.xlu0 %v245, 64
    %v248 = vpop.permute.xlu0 %247
    %v250 = vadd.f32 %v217, %v248
    %v251 = vadd.f32 %v220, %v248
    %253 = vrot.lane.b32.xlu0 %v239, 96
    %v254 = vpop.permute.xlu0 %253
    %vm255 = vcmask 130048
    %v257 = vsel %vm255, %v228, 0
    %v259 = vsel %vm255, %v254, 0
    %261 = vmatprep.subr.mxu0 0.0
    %262 = vmatpush1.xpose.msra.mxu0 0.0
    %263 = vmatprep.subr.mxu0 0.0
    %264 = vmatpush1.xpose.msra.mxu0 0.0
    %265 = vmatprep.subr.mxu0 0.0
    %266 = vmatpush1.xpose.msra.mxu0 0.0
    %267 = vmatprep.subr.mxu0 0.0
    %268 = vmatpush1.xpose.msra.mxu0 0.0
    %269 = vmatprep.subr.mxu0 0.0
    %270 = vmatpush1.xpose.msra.mxu0 0.0
    %271 = vmatprep.subr.mxu0 0.0
    %272 = vmatpush1.xpose.msra.mxu0 0.0
    %273 = vmatprep.subr.mxu0 0.0
    %274 = vmatpush1.xpose.msra.mxu0 0.0
    %275 = vmatprep.subr.mxu0 0.0
    %276 = vmatpush1.xpose.msra.mxu0 0.0
    %277 = vmatprep.subr.mxu0 0.0
    %278 = vmatpush1.xpose.msra.mxu0 0.0
    %279 = vmatprep.subr.mxu0 0.0
    %280 = vmatpush1.xpose.msra.mxu0 0.0
    %281 = vmatprep.subr.mxu0 0.0
    %282 = vmatpush1.xpose.msra.mxu0 0.0
    %283 = vmatprep.subr.mxu0 0.0
    %284 = vmatpush1.xpose.msra.mxu0 0.0
    %285 = vmatprep.subr.mxu0 0.0
    %286 = vmatpush1.xpose.msra.mxu0 0.0
    %287 = vmatprep.subr.mxu0 0.0
    %288 = vmatpush1.xpose.msra.mxu0 0.0
    %289 = vmatprep.subr.mxu0 0.0
    %290 = vmatpush1.xpose.msra.mxu0 0.0
    %291 = vmatprep.subr.mxu0 0.0
    %292 = vmatpush1.xpose.msra.mxu0 %v259
    %293 = vmatprep.subr.mxu0 0.0
    %294 = vmatpush2.xpose.msra.mxu0 0.0
    %295 = vmatprep.subr.mxu0 0.0
    %296 = vmatpush2.xpose.msra.mxu0 0.0
    %297 = vmatprep.subr.mxu0 0.0
    %298 = vmatpush2.xpose.msra.mxu0 0.0
    %299 = vmatprep.subr.mxu0 0.0
    %300 = vmatpush2.xpose.msra.mxu0 0.0
    %301 = vmatprep.subr.mxu0 0.0
    %302 = vmatpush2.xpose.msra.mxu0 0.0
    %303 = vmatprep.subr.mxu0 0.0
    %304 = vmatpush2.xpose.msra.mxu0 0.0
    %305 = vmatprep.subr.mxu0 0.0
    %306 = vmatpush2.xpose.msra.mxu0 0.0
    %307 = vmatprep.subr.mxu0 0.0
    %308 = vmatpush2.xpose.msra.mxu0 0.0
    %309 = vmatprep.subr.mxu0 0.0
    %310 = vmatpush2.xpose.msra.mxu0 0.0
    %311 = vmatprep.subr.mxu0 0.0
    %312 = vmatpush2.xpose.msra.mxu0 0.0
    %313 = vmatprep.subr.mxu0 0.0
    %314 = vmatpush2.xpose.msra.mxu0 0.0
    %315 = vmatprep.subr.mxu0 0.0
    %316 = vmatpush2.xpose.msra.mxu0 0.0
    %317 = vmatprep.subr.mxu0 0.0
    %318 = vmatpush2.xpose.msra.mxu0 0.0
    %319 = vmatprep.subr.mxu0 0.0
    %320 = vmatpush2.xpose.msra.mxu0 0.0
    %321 = vmatprep.subr.mxu0 0.0
    %322 = vmatpush2.xpose.msra.mxu0 0.0
    %323 = vmatprep.subr.mxu0 0.0
    %324 = vmatpush2.xpose.msra.mxu0 0.0
    %325 = vmatprep.mubr.f32.mxu0 0.0
    %326 = vmatmul.mubr.f32.gmra.mxu0 %v257
    %v327 = vpop.f32.mrf.mxu0
    %v328 = vadd.f32 0.0, %v327
    %v329 = vpop.f32.mrf.mxu0
    %330 = vdwg.mxu0
    %332 = vrot.lane.b32.xlu0 %v240, 96
    %v333 = vpop.permute.xlu0 %332
    %v335 = vsel %vm255, %v229, 0
    %v337 = vsel %vm255, %v333, 0
    %339 = vmatprep.subr.mxu0 0.0
    %340 = vmatpush1.xpose.msra.mxu0 0.0
    %341 = vmatprep.subr.mxu0 0.0
    %342 = vmatpush1.xpose.msra.mxu0 0.0
    %343 = vmatprep.subr.mxu0 0.0
    %344 = vmatpush1.xpose.msra.mxu0 0.0
    %345 = vmatprep.subr.mxu0 0.0
    %346 = vmatpush1.xpose.msra.mxu0 0.0
    %347 = vmatprep.subr.mxu0 0.0
    %348 = vmatpush1.xpose.msra.mxu0 0.0
    %349 = vmatprep.subr.mxu0 0.0
    %350 = vmatpush1.xpose.msra.mxu0 0.0
    %351 = vmatprep.subr.mxu0 0.0
    %352 = vmatpush1.xpose.msra.mxu0 0.0
    %353 = vmatprep.subr.mxu0 0.0
    %354 = vmatpush1.xpose.msra.mxu0 0.0
    %355 = vmatprep.subr.mxu0 0.0
    %356 = vmatpush1.xpose.msra.mxu0 0.0
    %357 = vmatprep.subr.mxu0 0.0
    %358 = vmatpush1.xpose.msra.mxu0 0.0
    %359 = vmatprep.subr.mxu0 0.0
    %360 = vmatpush1.xpose.msra.mxu0 0.0
    %361 = vmatprep.subr.mxu0 0.0
    %362 = vmatpush1.xpose.msra.mxu0 0.0
    %363 = vmatprep.subr.mxu0 0.0
    %364 = vmatpush1.xpose.msra.mxu0 0.0
    %365 = vmatprep.subr.mxu0 0.0
    %366 = vmatpush1.xpose.msra.mxu0 0.0
    %367 = vmatprep.subr.mxu0 0.0
    %368 = vmatpush1.xpose.msra.mxu0 0.0
    %369 = vmatprep.subr.mxu0 0.0
    %370 = vmatpush1.xpose.msra.mxu0 %v337
    %371 = vmatprep.subr.mxu0 0.0
    %372 = vmatpush2.xpose.msra.mxu0 0.0
    %373 = vmatprep.subr.mxu0 0.0
    %374 = vmatpush2.xpose.msra.mxu0 0.0
    %375 = vmatprep.subr.mxu0 0.0
    %376 = vmatpush2.xpose.msra.mxu0 0.0
    %377 = vmatprep.subr.mxu0 0.0
    %378 = vmatpush2.xpose.msra.mxu0 0.0
    %379 = vmatprep.subr.mxu0 0.0
    %380 = vmatpush2.xpose.msra.mxu0 0.0
    %381 = vmatprep.subr.mxu0 0.0
    %382 = vmatpush2.xpose.msra.mxu0 0.0
    %383 = vmatprep.subr.mxu0 0.0
    %384 = vmatpush2.xpose.msra.mxu0 0.0
    %385 = vmatprep.subr.mxu0 0.0
    %386 = vmatpush2.xpose.msra.mxu0 0.0
    %387 = vmatprep.subr.mxu0 0.0
    %388 = vmatpush2.xpose.msra.mxu0 0.0
    %389 = vmatprep.subr.mxu0 0.0
    %390 = vmatpush2.xpose.msra.mxu0 0.0
    %391 = vmatprep.subr.mxu0 0.0
    %392 = vmatpush2.xpose.msra.mxu0 0.0
    %393 = vmatprep.subr.mxu0 0.0
    %394 = vmatpush2.xpose.msra.mxu0 0.0
    %395 = vmatprep.subr.mxu0 0.0
    %396 = vmatpush2.xpose.msra.mxu0 0.0
    %397 = vmatprep.subr.mxu0 0.0
    %398 = vmatpush2.xpose.msra.mxu0 0.0
    %399 = vmatprep.subr.mxu0 0.0
    %400 = vmatpush2.xpose.msra.mxu0 0.0
    %401 = vmatprep.subr.mxu0 0.0
    %402 = vmatpush2.xpose.msra.mxu0 0.0
    %403 = vmatprep.mubr.f32.mxu0 0.0
    %404 = vmatmul.mubr.f32.gmra.mxu0 %v335
    %v405 = vpop.f32.mrf.mxu0
    %v406 = vadd.f32 0.0, %v405
    %v407 = vpop.f32.mrf.mxu0
    %408 = vdwg.mxu0
    %v409 = vmul.f32 %v328, 0.25
    %v410 = vmul.f32 %v406, 0.25
    %v411 = vmul.f32 %v409, 1.442695
    %v412 = vpow.pop %v411
    %v413 = vmul.f32 %v410, 1.442695
    %v414 = vpow.pop %v413
    %v415 = vmul.f32 %v412, %v129
    %v416 = vmul.f32 %v414, %v129
    %vm417 = vcmask 64512
    %v418 = vsel %vm417, %v415, 0.0
    %419 = vadd.xlane.f32.xlu0 %v418
    %v420 = vpop.xlane.xlu0 %419
    %v421 = vsel %vm417, %v416, 0.0
    %422 = vadd.xlane.f32.xlu0 %v421
    %v423 = vpop.xlane.xlu0 %422
    %v424 = vrcp.pop %v420
    %v425 = vrcp.pop %v423
    %v426 = vmul.f32 %v415, %v424
    %v427 = vmul.f32 %v416, %v425
    %429 = vrot.lane.b32.xlu0 %v250, 64
    %v430 = vpop.permute.xlu0 %429
    %v433 = vsel %vm417, %v426, 0
    %435 = vmatprep.subr.mxu0 0.0
    %436 = vmatpush1.msra.mxu0 0.0
    %437 = vmatprep.subr.mxu0 0.0
    %438 = vmatpush1.msra.mxu0 0.0
    %439 = vmatprep.subr.mxu0 0.0
    %440 = vmatpush1.msra.mxu0 0.0
    %441 = vmatprep.subr.mxu0 0.0
    %442 = vmatpush1.msra.mxu0 0.0
    %443 = vmatprep.subr.mxu0 0.0
    %444 = vmatpush1.msra.mxu0 0.0
    %445 = vmatprep.subr.mxu0 0.0
    %446 = vmatpush1.msra.mxu0 0.0
    %447 = vmatprep.subr.mxu0 0.0
    %448 = vmatpush1.msra.mxu0 0.0
    %449 = vmatprep.subr.mxu0 0.0
    %450 = vmatpush1.msra.mxu0 0.0
    %451 = vmatprep.subr.mxu0 0.0
    %452 = vmatpush1.msra.mxu0 0.0
    %453 = vmatprep.subr.mxu0 0.0
    %454 = vmatpush1.msra.mxu0 0.0
    %455 = vmatprep.subr.mxu0 0.0
    %456 = vmatpush1.msra.mxu0 0.0
    %457 = vmatprep.subr.mxu0 0.0
    %458 = vmatpush1.msra.mxu0 0.0
    %459 = vmatprep.subr.mxu0 0.0
    %460 = vmatpush1.msra.mxu0 0.0
    %461 = vmatprep.subr.mxu0 0.0
    %462 = vmatpush1.msra.mxu0 0.0
    %463 = vmatprep.subr.mxu0 0.0
    %464 = vmatpush1.msra.mxu0 0.0
    %465 = vmatprep.subr.mxu0 0.0
    %466 = vmatpush1.msra.mxu0 %v430
    %467 = vmatprep.subr.mxu0 0.0
    %468 = vmatpush2.msra.mxu0 0.0
    %469 = vmatprep.subr.mxu0 0.0
    %470 = vmatpush2.msra.mxu0 0.0
    %471 = vmatprep.subr.mxu0 0.0
    %472 = vmatpush2.msra.mxu0 0.0
    %473 = vmatprep.subr.mxu0 0.0
    %474 = vmatpush2.msra.mxu0 0.0
    %475 = vmatprep.subr.mxu0 0.0
    %476 = vmatpush2.msra.mxu0 0.0
    %477 = vmatprep.subr.mxu0 0.0
    %478 = vmatpush2.msra.mxu0 0.0
    %479 = vmatprep.subr.mxu0 0.0
    %480 = vmatpush2.msra.mxu0 0.0
    %481 = vmatprep.subr.mxu0 0.0
    %482 = vmatpush2.msra.mxu0 0.0
    %483 = vmatprep.subr.mxu0 0.0
    %484 = vmatpush2.msra.mxu0 0.0
    %485 = vmatprep.subr.mxu0 0.0
    %486 = vmatpush2.msra.mxu0 0.0
    %487 = vmatprep.subr.mxu0 0.0
    %488 = vmatpush2.msra.mxu0 0.0
    %489 = vmatprep.subr.mxu0 0.0
    %490 = vmatpush2.msra.mxu0 0.0
    %491 = vmatprep.subr.mxu0 0.0
    %492 = vmatpush2.msra.mxu0 0.0
    %493 = vmatprep.subr.mxu0 0.0
    %494 = vmatpush2.msra.mxu0 0.0
    %495 = vmatprep.subr.mxu0 0.0
    %496 = vmatpush2.msra.mxu0 0.0
    %497 = vmatprep.subr.mxu0 0.0
    %498 = vmatpush2.msra.mxu0 0.0
    %499 = vmatprep.mubr.f32.mxu0 0.0
    %500 = vmatmul.mubr.f32.gmra.mxu0 %v433
    %v501 = vpop.f32.mrf.mxu0
    %v502 = vadd.f32 0.0, %v501
    %v503 = vpop.f32.mrf.mxu0
    %504 = vdwg.mxu0
    %506 = vrot.lane.b32.xlu0 %v251, 64
    %v507 = vpop.permute.xlu0 %506
    %v510 = vsel %vm417, %v427, 0
    %512 = vmatprep.subr.mxu0 0.0
    %513 = vmatpush1.msra.mxu0 0.0
    %514 = vmatprep.subr.mxu0 0.0
    %515 = vmatpush1.msra.mxu0 0.0
    %516 = vmatprep.subr.mxu0 0.0
    %517 = vmatpush1.msra.mxu0 0.0
    %518 = vmatprep.subr.mxu0 0.0
    %519 = vmatpush1.msra.mxu0 0.0
    %520 = vmatprep.subr.mxu0 0.0
    %521 = vmatpush1.msra.mxu0 0.0
    %522 = vmatprep.subr.mxu0 0.0
    %523 = vmatpush1.msra.mxu0 0.0
    %524 = vmatprep.subr.mxu0 0.0
    %525 = vmatpush1.msra.mxu0 0.0
    %526 = vmatprep.subr.mxu0 0.0
    %527 = vmatpush1.msra.mxu0 0.0
    %528 = vmatprep.subr.mxu0 0.0
    %529 = vmatpush1.msra.mxu0 0.0
    %530 = vmatprep.subr.mxu0 0.0
    %531 = vmatpush1.msra.mxu0 0.0
    %532 = vmatprep.subr.mxu0 0.0
    %533 = vmatpush1.msra.mxu0 0.0
    %534 = vmatprep.subr.mxu0 0.0
    %535 = vmatpush1.msra.mxu0 0.0
    %536 = vmatprep.subr.mxu0 0.0
    %537 = vmatpush1.msra.mxu0 0.0
    %538 = vmatprep.subr.mxu0 0.0
    %539 = vmatpush1.msra.mxu0 0.0
    %540 = vmatprep.subr.mxu0 0.0
    %541 = vmatpush1.msra.mxu0 0.0
    %542 = vmatprep.subr.mxu0 0.0
    %543 = vmatpush1.msra.mxu0 %v507
    %544 = vmatprep.subr.mxu0 0.0
    %545 = vmatpush2.msra.mxu0 0.0
    %546 = vmatprep.subr.mxu0 0.0
    %547 = vmatpush2.msra.mxu0 0.0
    %548 = vmatprep.subr.mxu0 0.0
    %549 = vmatpush2.msra.mxu0 0.0
    %550 = vmatprep.subr.mxu0 0.0
    %551 = vmatpush2.msra.mxu0 0.0
    %552 = vmatprep.subr.mxu0 0.0
    %553 = vmatpush2.msra.mxu0 0.0
    %554 = vmatprep.subr.mxu0 0.0
    %555 = vmatpush2.msra.mxu0 0.0
    %556 = vmatprep.subr.mxu0 0.0
    %557 = vmatpush2.msra.mxu0 0.0
    %558 = vmatprep.subr.mxu0 0.0
    %559 = vmatpush2.msra.mxu0 0.0
    %560 = vmatprep.subr.mxu0 0.0
    %561 = vmatpush2.msra.mxu0 0.0
    %562 = vmatprep.subr.mxu0 0.0
    %563 = vmatpush2.msra.mxu0 0.0
    %564 = vmatprep.subr.mxu0 0.0
    %565 = vmatpush2.msra.mxu0 0.0
    %566 = vmatprep.subr.mxu0 0.0
    %567 = vmatpush2.msra.mxu0 0.0
    %568 = vmatprep.subr.mxu0 0.0
    %569 = vmatpush2.msra.mxu0 0.0
    %570 = vmatprep.subr.mxu0 0.0
    %571 = vmatpush2.msra.mxu0 0.0
    %572 = vmatprep.subr.mxu0 0.0
    %573 = vmatpush2.msra.mxu0 0.0
    %574 = vmatprep.subr.mxu0 0.0
    %575 = vmatpush2.msra.mxu0 0.0
    %576 = vmatprep.mubr.f32.mxu0 0.0
    %577 = vmatmul.mubr.f32.gmra.mxu0 %v510
    %v578 = vpop.f32.mrf.mxu0
    %v579 = vadd.f32 0.0, %v578
    %v580 = vpop.f32.mrf.mxu0
    %581 = vdwg.mxu0
    %v582 = vld [vmem:[%s1 + $0xd0] sm:$0xff]
    %v583 = vld [vmem:[%s1 + $0xd8] sm:$0xff]
    %v584 = vpack.c.bf16 %v579, %v502
    %v585 = vpack.c.bf16 %v583, %v582
    %586 = vrot.lane.b32.xlu0 %v228, 112
    %v587 = vpop.permute.xlu0 %586
    %588 = vrot.lane.b32.xlu0 %v239, 80
    %v589 = vpop.permute.xlu0 %588
    %v590 = vsel %vm255, %v587, 0
    %v592 = vsel %vm255, %v589, 0
    %594 = vmatprep.subr.mxu0 0.0
    %595 = vmatpush1.xpose.msra.mxu0 0.0
    %596 = vmatprep.subr.mxu0 0.0
    %597 = vmatpush1.xpose.msra.mxu0 0.0
    %598 = vmatprep.subr.mxu0 0.0
    %599 = vmatpush1.xpose.msra.mxu0 0.0
    %600 = vmatprep.subr.mxu0 0.0
    %601 = vmatpush1.xpose.msra.mxu0 0.0
    %602 = vmatprep.subr.mxu0 0.0
    %603 = vmatpush1.xpose.msra.mxu0 0.0
    %604 = vmatprep.subr.mxu0 0.0
    %605 = vmatpush1.xpose.msra.mxu0 0.0
    %606 = vmatprep.subr.mxu0 0.0
    %607 = vmatpush1.xpose.msra.mxu0 0.0
    %608 = vmatprep.subr.mxu0 0.0
    %609 = vmatpush1.xpose.msra.mxu0 0.0
    %610 = vmatprep.subr.mxu0 0.0
    %611 = vmatpush1.xpose.msra.mxu0 0.0
    %612 = vmatprep.subr.mxu0 0.0
    %613 = vmatpush1.xpose.msra.mxu0 0.0
    %614 = vmatprep.subr.mxu0 0.0
    %615 = vmatpush1.xpose.msra.mxu0 0.0
    %616 = vmatprep.subr.mxu0 0.0
    %617 = vmatpush1.xpose.msra.mxu0 0.0
    %618 = vmatprep.subr.mxu0 0.0
    %619 = vmatpush1.xpose.msra.mxu0 0.0
    %620 = vmatprep.subr.mxu0 0.0
    %621 = vmatpush1.xpose.msra.mxu0 0.0
    %622 = vmatprep.subr.mxu0 0.0
    %623 = vmatpush1.xpose.msra.mxu0 0.0
    %624 = vmatprep.subr.mxu0 0.0
    %625 = vmatpush1.xpose.msra.mxu0 %v592
    %626 = vmatprep.subr.mxu0 0.0
    %627 = vmatpush2.xpose.msra.mxu0 0.0
    %628 = vmatprep.subr.mxu0 0.0
    %629 = vmatpush2.xpose.msra.mxu0 0.0
    %630 = vmatprep.subr.mxu0 0.0
    %631 = vmatpush2.xpose.msra.mxu0 0.0
    %632 = vmatprep.subr.mxu0 0.0
    %633 = vmatpush2.xpose.msra.mxu0 0.0
    %634 = vmatprep.subr.mxu0 0.0
    %635 = vmatpush2.xpose.msra.mxu0 0.0
    %636 = vmatprep.subr.mxu0 0.0
    %637 = vmatpush2.xpose.msra.mxu0 0.0
    %638 = vmatprep.subr.mxu0 0.0
    %639 = vmatpush2.xpose.msra.mxu0 0.0
    %640 = vmatprep.subr.mxu0 0.0
    %641 = vmatpush2.xpose.msra.mxu0 0.0
    %642 = vmatprep.subr.mxu0 0.0
    %643 = vmatpush2.xpose.msra.mxu0 0.0
    %644 = vmatprep.subr.mxu0 0.0
    %645 = vmatpush2.xpose.msra.mxu0 0.0
    %646 = vmatprep.subr.mxu0 0.0
    %647 = vmatpush2.xpose.msra.mxu0 0.0
    %648 = vmatprep.subr.mxu0 0.0
    %649 = vmatpush2.xpose.msra.mxu0 0.0
    %650 = vmatprep.subr.mxu0 0.0
    %651 = vmatpush2.xpose.msra.mxu0 0.0
    %652 = vmatprep.subr.mxu0 0.0
    %653 = vmatpush2.xpose.msra.mxu0 0.0
    %654 = vmatprep.subr.mxu0 0.0
    %655 = vmatpush2.xpose.msra.mxu0 0.0
    %656 = vmatprep.subr.mxu0 0.0
    %657 = vmatpush2.xpose.msra.mxu0 0.0
    %658 = vmatprep.mubr.f32.mxu0 0.0
    %659 = vmatmul.mubr.f32.gmra.mxu0 %v590
    %v660 = vpop.f32.mrf.mxu0
    %v661 = vadd.f32 0.0, %v660
    %v662 = vpop.f32.mrf.mxu0
    %663 = vdwg.mxu0
    %664 = vrot.lane.b32.xlu0 %v229, 112
    %v665 = vpop.permute.xlu0 %664
    %666 = vrot.lane.b32.xlu0 %v240, 80
    %v667 = vpop.permute.xlu0 %666
    %v668 = vsel %vm255, %v665, 0
    %v670 = vsel %vm255, %v667, 0
    %672 = vmatprep.subr.mxu0 0.0
    %673 = vmatpush1.xpose.msra.mxu0 0.0
    %674 = vmatprep.subr.mxu0 0.0
    %675 = vmatpush1.xpose.msra.mxu0 0.0
    %676 = vmatprep.subr.mxu0 0.0
    %677 = vmatpush1.xpose.msra.mxu0 0.0
    %678 = vmatprep.subr.mxu0 0.0
    %679 = vmatpush1.xpose.msra.mxu0 0.0
    %680 = vmatprep.subr.mxu0 0.0
    %681 = vmatpush1.xpose.msra.mxu0 0.0
    %682 = vmatprep.subr.mxu0 0.0
    %683 = vmatpush1.xpose.msra.mxu0 0.0
    %684 = vmatprep.subr.mxu0 0.0
    %685 = vmatpush1.xpose.msra.mxu0 0.0
    %686 = vmatprep.subr.mxu0 0.0
    %687 = vmatpush1.xpose.msra.mxu0 0.0
    %688 = vmatprep.subr.mxu0 0.0
    %689 = vmatpush1.xpose.msra.mxu0 0.0
    %690 = vmatprep.subr.mxu0 0.0
    %691 = vmatpush1.xpose.msra.mxu0 0.0
    %692 = vmatprep.subr.mxu0 0.0
    %693 = vmatpush1.xpose.msra.mxu0 0.0
    %694 = vmatprep.subr.mxu0 0.0
    %695 = vmatpush1.xpose.msra.mxu0 0.0
    %696 = vmatprep.subr.mxu0 0.0
    %697 = vmatpush1.xpose.msra.mxu0 0.0
    %698 = vmatprep.subr.mxu0 0.0
    %699 = vmatpush1.xpose.msra.mxu0 0.0
    %700 = vmatprep.subr.mxu0 0.0
    %701 = vmatpush1.xpose.msra.mxu0 0.0
    %702 = vmatprep.subr.mxu0 0.0
    %703 = vmatpush1.xpose.msra.mxu0 %v670
    %704 = vmatprep.subr.mxu0 0.0
    %705 = vmatpush2.xpose.msra.mxu0 0.0
    %706 = vmatprep.subr.mxu0 0.0
    %707 = vmatpush2.xpose.msra.mxu0 0.0
    %708 = vmatprep.subr.mxu0 0.0
    %709 = vmatpush2.xpose.msra.mxu0 0.0
    %710 = vmatprep.subr.mxu0 0.0
    %711 = vmatpush2.xpose.msra.mxu0 0.0
    %712 = vmatprep.subr.mxu0 0.0
    %713 = vmatpush2.xpose.msra.mxu0 0.0
    %714 = vmatprep.subr.mxu0 0.0
    %715 = vmatpush2.xpose.msra.mxu0 0.0
    %716 = vmatprep.subr.mxu0 0.0
    %717 = vmatpush2.xpose.msra.mxu0 0.0
    %718 = vmatprep.subr.mxu0 0.0
    %719 = vmatpush2.xpose.msra.mxu0 0.0
    %720 = vmatprep.subr.mxu0 0.0
    %721 = vmatpush2.xpose.msra.mxu0 0.0
    %722 = vmatprep.subr.mxu0 0.0
    %723 = vmatpush2.xpose.msra.mxu0 0.0
    %724 = vmatprep.subr.mxu0 0.0
    %725 = vmatpush2.xpose.msra.mxu0 0.0
    %726 = vmatprep.subr.mxu0 0.0
    %727 = vmatpush2.xpose.msra.mxu0 0.0
    %728 = vmatprep.subr.mxu0 0.0
    %729 = vmatpush2.xpose.msra.mxu0 0.0
    %730 = vmatprep.subr.mxu0 0.0
    %731 = vmatpush2.xpose.msra.mxu0 0.0
    %732 = vmatprep.subr.mxu0 0.0
    %733 = vmatpush2.xpose.msra.mxu0 0.0
    %734 = vmatprep.subr.mxu0 0.0
    %735 = vmatpush2.xpose.msra.mxu0 0.0
    %736 = vmatprep.mubr.f32.mxu0 0.0
    %737 = vmatmul.mubr.f32.gmra.mxu0 %v668
    %v738 = vpop.f32.mrf.mxu0
    %v739 = vadd.f32 0.0, %v738
    %v740 = vpop.f32.mrf.mxu0
    %741 = vdwg.mxu0
    %v742 = vmul.f32 %v661, 0.25
    %v743 = vmul.f32 %v739, 0.25
    %v744 = vmul.f32 %v742, 1.442695
    %v745 = vpow.pop %v744
    %v746 = vmul.f32 %v743, 1.442695
    %v747 = vpow.pop %v746
    %v748 = vmul.f32 %v745, %v129
    %v749 = vmul.f32 %v747, %v129
    %v750 = vsel %vm417, %v748, 0.0
    %751 = vadd.xlane.f32.xlu0 %v750
    %v752 = vpop.xlane.xlu0 %751
    %v753 = vsel %vm417, %v749, 0.0
    %754 = vadd.xlane.f32.xlu0 %v753
    %v755 = vpop.xlane.xlu0 %754
    %v756 = vrcp.pop %v752
    %v757 = vrcp.pop %v755
    %v758 = vmul.f32 %v748, %v756
    %v759 = vmul.f32 %v749, %v757
    %760 = vrot.lane.b32.xlu0 %v250, 48
    %v761 = vpop.permute.xlu0 %760
    %v764 = vsel %vm417, %v758, 0
    %766 = vmatprep.subr.mxu0 0.0
    %767 = vmatpush1.msra.mxu0 0.0
    %768 = vmatprep.subr.mxu0 0.0
    %769 = vmatpush1.msra.mxu0 0.0
    %770 = vmatprep.subr.mxu0 0.0
    %771 = vmatpush1.msra.mxu0 0.0
    %772 = vmatprep.subr.mxu0 0.0
    %773 = vmatpush1.msra.mxu0 0.0
    %774 = vmatprep.subr.mxu0 0.0
    %775 = vmatpush1.msra.mxu0 0.0
    %776 = vmatprep.subr.mxu0 0.0
    %777 = vmatpush1.msra.mxu0 0.0
    %778 = vmatprep.subr.mxu0 0.0
    %779 = vmatpush1.msra.mxu0 0.0
    %780 = vmatprep.subr.mxu0 0.0
    %781 = vmatpush1.msra.mxu0 0.0
    %782 = vmatprep.subr.mxu0 0.0
    %783 = vmatpush1.msra.mxu0 0.0
    %784 = vmatprep.subr.mxu0 0.0
    %785 = vmatpush1.msra.mxu0 0.0
    %786 = vmatprep.subr.mxu0 0.0
    %787 = vmatpush1.msra.mxu0 0.0
    %788 = vmatprep.subr.mxu0 0.0
    %789 = vmatpush1.msra.mxu0 0.0
    %790 = vmatprep.subr.mxu0 0.0
    %791 = vmatpush1.msra.mxu0 0.0
    %792 = vmatprep.subr.mxu0 0.0
    %793 = vmatpush1.msra.mxu0 0.0
    %794 = vmatprep.subr.mxu0 0.0
    %795 = vmatpush1.msra.mxu0 0.0
    %796 = vmatprep.subr.mxu0 0.0
    %797 = vmatpush1.msra.mxu0 %v761
    %798 = vmatprep.subr.mxu0 0.0
    %799 = vmatpush2.msra.mxu0 0.0
    %800 = vmatprep.subr.mxu0 0.0
    %801 = vmatpush2.msra.mxu0 0.0
    %802 = vmatprep.subr.mxu0 0.0
    %803 = vmatpush2.msra.mxu0 0.0
    %804 = vmatprep.subr.mxu0 0.0
    %805 = vmatpush2.msra.mxu0 0.0
    %806 = vmatprep.subr.mxu0 0.0
    %807 = vmatpush2.msra.mxu0 0.0
    %808 = vmatprep.subr.mxu0 0.0
    %809 = vmatpush2.msra.mxu0 0.0
    %810 = vmatprep.subr.mxu0 0.0
    %811 = vmatpush2.msra.mxu0 0.0
    %812 = vmatprep.subr.mxu0 0.0
    %813 = vmatpush2.msra.mxu0 0.0
    %814 = vmatprep.subr.mxu0 0.0
    %815 = vmatpush2.msra.mxu0 0.0
    %816 = vmatprep.subr.mxu0 0.0
    %817 = vmatpush2.msra.mxu0 0.0
    %818 = vmatprep.subr.mxu0 0.0
    %819 = vmatpush2.msra.mxu0 0.0
    %820 = vmatprep.subr.mxu0 0.0
    %821 = vmatpush2.msra.mxu0 0.0
    %822 = vmatprep.subr.mxu0 0.0
    %823 = vmatpush2.msra.mxu0 0.0
    %824 = vmatprep.subr.mxu0 0.0
    %825 = vmatpush2.msra.mxu0 0.0
    %826 = vmatprep.subr.mxu0 0.0
    %827 = vmatpush2.msra.mxu0 0.0
    %828 = vmatprep.subr.mxu0 0.0
    %829 = vmatpush2.msra.mxu0 0.0
    %830 = vmatprep.mubr.f32.mxu0 0.0
    %831 = vmatmul.mubr.f32.gmra.mxu0 %v764
    %v832 = vpop.f32.mrf.mxu0
    %v833 = vadd.f32 0.0, %v832
    %v834 = vpop.f32.mrf.mxu0
    %835 = vdwg.mxu0
    %836 = vrot.lane.b32.xlu0 %v251, 48
    %v837 = vpop.permute.xlu0 %836
    %v840 = vsel %vm417, %v759, 0
    %842 = vmatprep.subr.mxu0 0.0
    %843 = vmatpush1.msra.mxu0 0.0
    %844 = vmatprep.subr.mxu0 0.0
    %845 = vmatpush1.msra.mxu0 0.0
    %846 = vmatprep.subr.mxu0 0.0
    %847 = vmatpush1.msra.mxu0 0.0
    %848 = vmatprep.subr.mxu0 0.0
    %849 = vmatpush1.msra.mxu0 0.0
    %850 = vmatprep.subr.mxu0 0.0
    %851 = vmatpush1.msra.mxu0 0.0
    %852 = vmatprep.subr.mxu0 0.0
    %853 = vmatpush1.msra.mxu0 0.0
    %854 = vmatprep.subr.mxu0 0.0
    %855 = vmatpush1.msra.mxu0 0.0
    %856 = vmatprep.subr.mxu0 0.0
    %857 = vmatpush1.msra.mxu0 0.0
    %858 = vmatprep.subr.mxu0 0.0
    %859 = vmatpush1.msra.mxu0 0.0
    %860 = vmatprep.subr.mxu0 0.0
    %861 = vmatpush1.msra.mxu0 0.0
    %862 = vmatprep.subr.mxu0 0.0
    %863 = vmatpush1.msra.mxu0 0.0
    %864 = vmatprep.subr.mxu0 0.0
    %865 = vmatpush1.msra.mxu0 0.0
    %866 = vmatprep.subr.mxu0 0.0
    %867 = vmatpush1.msra.mxu0 0.0
    %868 = vmatprep.subr.mxu0 0.0
    %869 = vmatpush1.msra.mxu0 0.0
    %870 = vmatprep.subr.mxu0 0.0
    %871 = vmatpush1.msra.mxu0 0.0
    %872 = vmatprep.subr.mxu0 0.0
    %873 = vmatpush1.msra.mxu0 %v837
    %874 = vmatprep.subr.mxu0 0.0
    %875 = vmatpush2.msra.mxu0 0.0
    %876 = vmatprep.subr.mxu0 0.0
    %877 = vmatpush2.msra.mxu0 0.0
    %878 = vmatprep.subr.mxu0 0.0
    %879 = vmatpush2.msra.mxu0 0.0
    %880 = vmatprep.subr.mxu0 0.0
    %881 = vmatpush2.msra.mxu0 0.0
    %882 = vmatprep.subr.mxu0 0.0
    %883 = vmatpush2.msra.mxu0 0.0
    %884 = vmatprep.subr.mxu0 0.0
    %885 = vmatpush2.msra.mxu0 0.0
    %886 = vmatprep.subr.mxu0 0.0
    %887 = vmatpush2.msra.mxu0 0.0
    %888 = vmatprep.subr.mxu0 0.0
    %889 = vmatpush2.msra.mxu0 0.0
    %890 = vmatprep.subr.mxu0 0.0
    %891 = vmatpush2.msra.mxu0 0.0
    %892 = vmatprep.subr.mxu0 0.0
    %893 = vmatpush2.msra.mxu0 0.0
    %894 = vmatprep.subr.mxu0 0.0
    %895 = vmatpush2.msra.mxu0 0.0
    %896 = vmatprep.subr.mxu0 0.0
    %897 = vmatpush2.msra.mxu0 0.0
    %898 = vmatprep.subr.mxu0 0.0
    %899 = vmatpush2.msra.mxu0 0.0
    %900 = vmatprep.subr.mxu0 0.0
    %901 = vmatpush2.msra.mxu0 0.0
    %902 = vmatprep.subr.mxu0 0.0
    %903 = vmatpush2.msra.mxu0 0.0
    %904 = vmatprep.subr.mxu0 0.0
    %905 = vmatpush2.msra.mxu0 0.0
    %906 = vmatprep.mubr.f32.mxu0 0.0
    %907 = vmatmul.mubr.f32.gmra.mxu0 %v840
    %v908 = vpop.f32.mrf.mxu0
    %v909 = vadd.f32 0.0, %v908
    %v910 = vpop.f32.mrf.mxu0
    %911 = vdwg.mxu0
    %v912 = vld [vmem:[%s1 + $0xe0] sm:$0xff]
    %v913 = vld [vmem:[%s1 + $0xe8] sm:$0xff]
    %v914 = vpack.c.bf16 %v909, %v833
    %v915 = vpack.c.bf16 %v913, %v912
    %v917 = vsel %vm255, %v914, 0
    %919 = vmatprep.subr.bf16.mxu0 0
    %920 = vmatpush1.bf16.msra.mxu0 0
    %921 = vmatprep.subr.bf16.mxu0 0
    %922 = vmatpush1.bf16.msra.mxu0 0
    %923 = vmatprep.subr.bf16.mxu0 0
    %924 = vmatpush1.bf16.msra.mxu0 0
    %925 = vmatprep.subr.bf16.mxu0 0
    %926 = vmatpush1.bf16.msra.mxu0 0
    %927 = vmatprep.subr.bf16.mxu0 0
    %928 = vmatpush1.bf16.msra.mxu0 0
    %929 = vmatprep.subr.bf16.mxu0 0
    %930 = vmatpush1.bf16.msra.mxu0 0
    %931 = vmatprep.subr.bf16.mxu0 0
    %932 = vmatpush1.bf16.msra.mxu0 0
    %933 = vmatprep.subr.bf16.mxu0 0
    %934 = vmatpush1.bf16.msra.mxu0 %v915
    %935 = vmatprep.subr.bf16.mxu0 0
    %936 = vmatpush2.bf16.msra.mxu0 0
    %937 = vmatprep.subr.bf16.mxu0 0
    %938 = vmatpush2.bf16.msra.mxu0 0
    %939 = vmatprep.subr.bf16.mxu0 0
    %940 = vmatpush2.bf16.msra.mxu0 0
    %941 = vmatprep.subr.bf16.mxu0 0
    %942 = vmatpush2.bf16.msra.mxu0 0
    %943 = vmatprep.subr.bf16.mxu0 0
    %944 = vmatpush2.bf16.msra.mxu0 0
    %945 = vmatprep.subr.bf16.mxu0 0
    %946 = vmatpush2.bf16.msra.mxu0 0
    %947 = vmatprep.subr.bf16.mxu0 0
    %948 = vmatpush2.bf16.msra.mxu0 0
    %949 = vmatprep.subr.bf16.mxu0 0
    %950 = vmatpush2.bf16.msra.mxu0 0
    %951 = vmatprep.mubr.bf16.mxu0 0
    %952 = vmatmul.mubr.bf16.gmra.mxu0 %v917
    %v953 = vpop.f32.mrf.mxu0
    %v954 = vadd.f32 0.0, %v953
    %v955 = vpop.f32.mrf.mxu0
    %v956 = vpop.f32.mrf.mxu0
    %v957 = vadd.f32 0.0, %v956
    %v958 = vpop.f32.mrf.mxu0
    %959 = vdwg.mxu0
    %v961 = vsel %vm255, %v584, 0
    %963 = vmatprep.subr.bf16.mxu0 0
    %964 = vmatpush1.bf16.msra.mxu0 0
    %965 = vmatprep.subr.bf16.mxu0 0
    %966 = vmatpush1.bf16.msra.mxu0 0
    %967 = vmatprep.subr.bf16.mxu0 0
    %968 = vmatpush1.bf16.msra.mxu0 0
    %969 = vmatprep.subr.bf16.mxu0 0
    %970 = vmatpush1.bf16.msra.mxu0 0
    %971 = vmatprep.subr.bf16.mxu0 0
    %972 = vmatpush1.bf16.msra.mxu0 0
    %973 = vmatprep.subr.bf16.mxu0 0
    %974 = vmatpush1.bf16.msra.mxu0 0
    %975 = vmatprep.subr.bf16.mxu0 0
    %976 = vmatpush1.bf16.msra.mxu0 0
    %977 = vmatprep.subr.bf16.mxu0 0
    %978 = vmatpush1.bf16.msra.mxu0 %v585
    %979 = vmatprep.subr.bf16.mxu0 0
    %980 = vmatpush2.bf16.msra.mxu0 0
    %981 = vmatprep.subr.bf16.mxu0 0
    %982 = vmatpush2.bf16.msra.mxu0 0
    %983 = vmatprep.subr.bf16.mxu0 0
    %984 = vmatpush2.bf16.msra.mxu0 0
    %985 = vmatprep.subr.bf16.mxu0 0
    %986 = vmatpush2.bf16.msra.mxu0 0
    %987 = vmatprep.subr.bf16.mxu0 0
    %988 = vmatpush2.bf16.msra.mxu0 0
    %989 = vmatprep.subr.bf16.mxu0 0
    %990 = vmatpush2.bf16.msra.mxu0 0
    %991 = vmatprep.subr.bf16.mxu0 0
    %992 = vmatpush2.bf16.msra.mxu0 0
    %993 = vmatprep.subr.bf16.mxu0 0
    %994 = vmatpush2.bf16.msra.mxu0 0
    %995 = vmatprep.mubr.bf16.mxu0 0
    %996 = vmatmul.mubr.bf16.gmra.mxu0 %v961
    %v997 = vpop.f32.mrf.mxu0
    %v998 = vadd.f32 %v954, %v997
    %v999 = vpop.f32.mrf.mxu0
    %v1000 = vpop.f32.mrf.mxu0
    %v1001 = vadd.f32 %v957, %v1000
    %v1002 = vpop.f32.mrf.mxu0
    %1003 = vdwg.mxu0
    %v1004 = vadd.f32 %v119, %v998
    %v1005 = vadd.f32 %v124, %v1001
    %v1006 = vld [vmem:[%s1 + $0x137] sm:$0x1]
    %v1007 = vlaneseq
    %v1008 = vshrl.u32 %v1007, 7
    %v1009 = vsub.s32 0, %v1008
    %v1010 = vrot.slane %v1006, %v1009
    %v1011 = vadd.f32 %v1004, %v1010
    %v1012 = vadd.f32 %v1005, %v1010
    %v1013 = vld [vmem:[%s1 + $0x132] sm:$0x1]
    %v1014 = vld [vmem:[%s1 + $0x133] sm:$0x1]
    %v1015 = vsel %vm132, %v1011, 0.0
    %1016 = vadd.xlane.f32.xlu0 %v1015
    %v1017 = vpop.xlane.xlu0 %1016
    %v1018 = vsel %vm132, %v1012, 0.0
    %1019 = vadd.xlane.f32.xlu0 %v1018
    %v1020 = vpop.xlane.xlu0 %1019
    %v1021 = vmul.f32 %v1017, %v139
    %v1022 = vmul.f32 %v1020, %v139
    %v1023 = vsub.f32 %v1011, %v1021
    %v1024 = vsub.f32 %v1012, %v1022
    %v1025 = vmul.f32 %v1023, %v1023
    %v1026 = vmul.f32 %v1024, %v1024
    %v1027 = vsel %vm132, %v1025, 0.0
    %1028 = vadd.xlane.f32.xlu0 %v1027
    %v1029 = vpop.xlane.xlu0 %1028
    %v1030 = vsel %vm132, %v1026, 0.0
    %1031 = vadd.xlane.f32.xlu0 %v1030
    %v1032 = vpop.xlane.xlu0 %1031
    %v1033 = vmul.f32 %v1029, %v139
    %v1034 = vmul.f32 %v1032, %v139
    %v1035 = vadd.f32 %v1033, 1e-12
    %v1036 = vadd.f32 %v1034, 1e-12
    %v1037 = vrsqrt.pop %v1035
    %v1038 = vrsqrt.pop %v1036
    %v1039 = vmul.f32 %v1023, %v1037
    %v1040 = vmul.f32 %v1024, %v1038
    %v1041 = vlaneseq
    %v1042 = vshrl.u32 %v1041, 7
    %v1043 = vsub.s32 0, %v1042
    %v1044 = vrot.slane %v1013, %v1043
    %v1045 = vmul.f32 %v1039, %v1044
    %v1046 = vmul.f32 %v1040, %v1044
    %v1047 = vlaneseq
    %v1048 = vshrl.u32 %v1047, 7
    %v1049 = vsub.s32 0, %v1048
    %v1050 = vrot.slane %v1014, %v1049
    %v1051 = vadd.f32 %v1045, %v1050
    %v1052 = vadd.f32 %v1046, %v1050
    %v1053 = vld [vmem:[%s3] sm:$0xff]
    %v1054 = vld [vmem:[%s3 + $0x8] sm:$0xff]
    %v1055 = vld [vmem:[%s3 + $0x10] sm:$0xff]
    %v1056 = vld [vmem:[%s3 + $0x18] sm:$0xff]
    %v1057 = vld [vmem:[%s3 + $0x40] sm:$0x1]
    %v1058 = vpack.c.bf16 %v1052, %v1051
    %v1059 = vpack.c.bf16 %v1054, %v1053
    %v1060 = vpack.c.bf16 %v1056, %v1055
    %v1061 = vlaneseq
    %v1062 = vshrl.u32 %v1061, 7
    %v1063 = vsub.s32 0, %v1062
    %v1064 = vrot.slane %v1057, %v1063
    %v1066 = vsel %vm132, %v1058, 0
    %1068 = vmatprep.subr.bf16.mxu0 0
    %1069 = vmatpush1.bf16.msra.mxu0 0
    %1070 = vmatprep.subr.bf16.mxu0 0
    %1071 = vmatpush1.bf16.msra.mxu0 0
    %1072 = vmatprep.subr.bf16.mxu0 0
    %1073 = vmatpush1.bf16.msra.mxu0 0
    %1074 = vmatprep.subr.bf16.mxu0 0
    %1075 = vmatpush1.bf16.msra.mxu0 0
    %1076 = vmatprep.subr.bf16.mxu0 0
    %1077 = vmatpush1.bf16.msra.mxu0 0
    %1078 = vmatprep.subr.bf16.mxu0 0
    %1079 = vmatpush1.bf16.msra.mxu0 0
    %1080 = vmatprep.subr.bf16.mxu0 0
    %1081 = vmatpush1.bf16.msra.mxu0 %v1060
    %1082 = vmatprep.subr.bf16.mxu0 0
    %1083 = vmatpush1.bf16.msra.mxu0 %v1059
    %1084 = vmatprep.subr.bf16.mxu0 0
    %1085 = vmatpush2.bf16.msra.mxu0 0
    %1086 = vmatprep.subr.bf16.mxu0 0
    %1087 = vmatpush2.bf16.msra.mxu0 0
    %1088 = vmatprep.subr.bf16.mxu0 0
    %1089 = vmatpush2.bf16.msra.mxu0 0
    %1090 = vmatprep.subr.bf16.mxu0 0
    %1091 = vmatpush2.bf16.msra.mxu0 0
    %1092 = vmatprep.subr.bf16.mxu0 0
    %1093 = vmatpush2.bf16.msra.mxu0 0
    %1094 = vmatprep.subr.bf16.mxu0 0
    %1095 = vmatpush2.bf16.msra.mxu0 0
    %1096 = vmatprep.subr.bf16.mxu0 0
    %1097 = vmatpush2.bf16.msra.mxu0 0
    %1098 = vmatprep.subr.bf16.mxu0 0
    %1099 = vmatpush2.bf16.msra.mxu0 0
    %1100 = vmatprep.mubr.bf16.mxu0 0
    %1101 = vmatmul.mubr.bf16.gmra.mxu0 %v1066
    %v1102 = vpop.f32.mrf.mxu0
    %v1103 = vadd.f32 %v1064, %v1102
    %v1104 = vpop.f32.mrf.mxu0
    %v1105 = vpop.f32.mrf.mxu0
    %v1106 = vadd.f32 %v1064, %v1105
    %v1107 = vpop.f32.mrf.mxu0
    %1108 = vdwg.mxu0
    %v1109 = vmul.f32 %v1103, %v1103
    %v1110 = vmul.f32 %v1106, %v1106
    %v1111 = vmul.f32 %v1103, %v1109
    %v1112 = vmul.f32 %v1106, %v1110
    %v1113 = vmul.f32 %v1111, 0.044715
    %v1114 = vmul.f32 %v1112, 0.044715
    %v1115 = vadd.f32 %v1103, %v1113
    %v1116 = vadd.f32 %v1106, %v1114
    %v1117 = vmul.f32 %v1115, 0.7978846
    %v1118 = vmul.f32 %v1116, 0.7978846
    %v1119 = vtanh.pop %v1117
    %v1120 = vtanh.pop %v1118
    %v1121 = vadd.f32 %v1119, 1.0
    %v1122 = vadd.f32 %v1120, 1.0
    %v1123 = vmul.f32 %v1121, 0.5
    %v1124 = vmul.f32 %v1122, 0.5
    %v1125 = vmul.f32 %v1103, %v1123
    %v1126 = vmul.f32 %v1106, %v1124
    %v1127 = vld [vmem:[%s1 + $0xf0] sm:$0xff]
    %v1128 = vld [vmem:[%s1 + $0xf8] sm:$0xff]
    %v1129 = vld [vmem:[%s1 + $0x100] sm:$0xff]
    %v1130 = vld [vmem:[%s1 + $0x108] sm:$0xff]
    %v1131 = vld [vmem:[%s1 + $0x110] sm:$0xff]
    %v1132 = vld [vmem:[%s1 + $0x118] sm:$0xff]
    %v1133 = vld [vmem:[%s1 + $0x120] sm:$0xff]
    %v1134 = vld [vmem:[%s1 + $0x128] sm:$0xff]
    %v1135 = vpack.c.bf16 %v1126, %v1125
    %v1136 = vpack.c.bf16 %v1128, %v1127
    %v1137 = vpack.c.bf16 %v1130, %v1129
    %v1138 = vpack.c.bf16 %v1132, %v1131
    %v1139 = vpack.c.bf16 %v1134, %v1133
    %v1140 = vld [vmem:[%s1 + $0x138] sm:$0x1]
    %v1141 = vlaneseq
    %v1142 = vshrl.u32 %v1141, 7
    %v1143 = vsub.s32 0, %v1142
    %v1144 = vrot.slane %v1140, %v1143
    %v1146 = vsel %vm66, %v1135, 0
    %1148 = vmatprep.subr.bf16.mxu0 0
    %1149 = vmatpush1.bf16.msra.mxu0 0
    %1150 = vmatprep.subr.bf16.mxu0 0
    %1151 = vmatpush1.bf16.msra.mxu0 0
    %1152 = vmatprep.subr.bf16.mxu0 0
    %1153 = vmatpush1.bf16.msra.mxu0 0
    %1154 = vmatprep.subr.bf16.mxu0 0
    %1155 = vmatpush1.bf16.msra.mxu0 0
    %1156 = vmatprep.subr.bf16.mxu0 0
    %1157 = vmatpush1.bf16.msra.mxu0 %v1139
    %1158 = vmatprep.subr.bf16.mxu0 0
    %1159 = vmatpush1.bf16.msra.mxu0 %v1138
    %1160 = vmatprep.subr.bf16.mxu0 0
    %1161 = vmatpush1.bf16.msra.mxu0 %v1137
    %1162 = vmatprep.subr.bf16.mxu0 0
    %1163 = vmatpush1.bf16.msra.mxu0 %v1136
    %1164 = vmatprep.subr.bf16.mxu0 0
    %1165 = vmatpush2.bf16.msra.mxu0 0
    %1166 = vmatprep.subr.bf16.mxu0 0
    %1167 = vmatpush2.bf16.msra.mxu0 0
    %1168 = vmatprep.subr.bf16.mxu0 0
    %1169 = vmatpush2.bf16.msra.mxu0 0
    %1170 = vmatprep.subr.bf16.mxu0 0
    %1171 = vmatpush2.bf16.msra.mxu0 0
    %1172 = vmatprep.subr.bf16.mxu0 0
    %1173 = vmatpush2.bf16.msra.mxu0 0
    %1174 = vmatprep.subr.bf16.mxu0 0
    %1175 = vmatpush2.bf16.msra.mxu0 0
    %1176 = vmatprep.subr.bf16.mxu0 0
    %1177 = vmatpush2.bf16.msra.mxu0 0
    %1178 = vmatprep.subr.bf16.mxu0 0
    %1179 = vmatpush2.bf16.msra.mxu0 0
    %1180 = vmatprep.mubr.bf16.mxu0 0
    %1181 = vmatmul.mubr.bf16.gmra.mxu0 %v1146
    %v1182 = vpop.f32.mrf.mxu0
    %v1183 = vadd.f32 %v1144, %v1182
    %v1184 = vpop.f32.mrf.mxu0
    %v1185 = vpop.f32.mrf.mxu0
    %v1186 = vadd.f32 %v1144, %v1185
    %v1187 = vpop.f32.mrf.mxu0
    %1188 = vdwg.mxu0
    %v1189 = vadd.f32 %v1011, %v1183
    %v1190 = vadd.f32 %v1012, %v1186
    %v1191 = vld [vmem:[%s1 + $0x1a0] sm:$0x1]
    %v1192 = vld [vmem:[%s1 + $0x1a1] sm:$0x1]
    %v1193 = vsel %vm132, %v1189, 0.0
    %1194 = vadd.xlane.f32.xlu0 %v1193
    %v1195 = vpop.xlane.xlu0 %1194
    %v1196 = vsel %vm132, %v1190, 0.0
    %1197 = vadd.xlane.f32.xlu0 %v1196
    %v1198 = vpop.xlane.xlu0 %1197
    %v1199 = vmul.f32 %v1195, %v139
    %v1200 = vmul.f32 %v1198, %v139
    %v1201 = vsub.f32 %v1189, %v1199
    %v1202 = vsub.f32 %v1190, %v1200
    %v1203 = vmul.f32 %v1201, %v1201
    %v1204 = vmul.f32 %v1202, %v1202
    %v1205 = vsel %vm132, %v1203, 0.0
    %1206 = vadd.xlane.f32.xlu0 %v1205
    %v1207 = vpop.xlane.xlu0 %1206
    %v1208 = vsel %vm132, %v1204, 0.0
    %1209 = vadd.xlane.f32.xlu0 %v1208
    %v1210 = vpop.xlane.xlu0 %1209
    %v1211 = vmul.f32 %v1207, %v139
    %v1212 = vmul.f32 %v1210, %v139
    %v1213 = vadd.f32 %v1211, 1e-12
    %v1214 = vadd.f32 %v1212, 1e-12
    %v1215 = vrsqrt.pop %v1213
    %v1216 = vrsqrt.pop %v1214
    %v1217 = vmul.f32 %v1201, %v1215
    %v1218 = vmul.f32 %v1202, %v1216
    %v1219 = vlaneseq
    %v1220 = vshrl.u32 %v1219, 7
    %v1221 = vsub.s32 0, %v1220
    %v1222 = vrot.slane %v1191, %v1221
    %v1223 = vmul.f32 %v1217, %v1222
    %v1224 = vmul.f32 %v1218, %v1222
    %v1225 = vlaneseq
    %v1226 = vshrl.u32 %v1225, 7
    %v1227 = vsub.s32 0, %v1226
    %v1228 = vrot.slane %v1192, %v1227
    %v1229 = vadd.f32 %v1223, %v1228
    %v1230 = vadd.f32 %v1224, %v1228
    %v1231 = vld [vmem:[%s2 + $0x20] sm:$0xff]
    %v1232 = vld [vmem:[%s2 + $0x28] sm:$0xff]
    %v1233 = vld [vmem:[%s2 + $0x30] sm:$0xff]
    %v1234 = vld [vmem:[%s2 + $0x38] sm:$0xff]
    %v1235 = vpack.c.bf16 %v1230, %v1229
    %v1236 = vpack.c.bf16 %v1232, %v1231
    %v1237 = vpack.c.bf16 %v1234, %v1233
    %v1239 = vsel %vm132, %v1235, 0
    %1241 = vmatprep.subr.bf16.mxu0 0
    %1242 = vmatpush1.bf16.msra.mxu0 0
    %1243 = vmatprep.subr.bf16.mxu0 0
    %1244 = vmatpush1.bf16.msra.mxu0 0
    %1245 = vmatprep.subr.bf16.mxu0 0
    %1246 = vmatpush1.bf16.msra.mxu0 0
    %1247 = vmatprep.subr.bf16.mxu0 0
    %1248 = vmatpush1.bf16.msra.mxu0 0
    %1249 = vmatprep.subr.bf16.mxu0 0
    %1250 = vmatpush1.bf16.msra.mxu0 0
    %1251 = vmatprep.subr.bf16.mxu0 0
    %1252 = vmatpush1.bf16.msra.mxu0 0
    %1253 = vmatprep.subr.bf16.mxu0 0
    %1254 = vmatpush1.bf16.msra.mxu0 %v1237
    %1255 = vmatprep.subr.bf16.mxu0 0
    %1256 = vmatpush1.bf16.msra.mxu0 %v1236
    %1257 = vmatprep.subr.bf16.mxu0 0
    %1258 = vmatpush2.bf16.msra.mxu0 0
    %1259 = vmatprep.subr.bf16.mxu0 0
    %1260 = vmatpush2.bf16.msra.mxu0 0
    %1261 = vmatprep.subr.bf16.mxu0 0
    %1262 = vmatpush2.bf16.msra.mxu0 0
    %1263 = vmatprep.subr.bf16.mxu0 0
    %1264 = vmatpush2.bf16.msra.mxu0 0
    %1265 = vmatprep.subr.bf16.mxu0 0
    %1266 = vmatpush2.bf16.msra.mxu0 0
    %1267 = vmatprep.subr.bf16.mxu0 0
    %1268 = vmatpush2.bf16.msra.mxu0 0
    %1269 = vmatprep.subr.bf16.mxu0 0
    %1270 = vmatpush2.bf16.msra.mxu0 0
    %1271 = vmatprep.subr.bf16.mxu0 0
    %1272 = vmatpush2.bf16.msra.mxu0 0
    %1273 = vmatprep.mubr.bf16.mxu0 0
    %1274 = vmatmul.mubr.bf16.gmra.mxu0 %v1239
    %v1275 = vpop.f32.mrf.mxu0
    %v1276 = vadd.f32 0.0, %v1275
    %v1277 = vpop.f32.mrf.mxu0
    %v1278 = vpop.f32.mrf.mxu0
    %v1279 = vadd.f32 0.0, %v1278
    %v1280 = vpop.f32.mrf.mxu0
    %1281 = vdwg.mxu0
    %v1282 = vld [vmem:[%s1 + $0x1a4] sm:$0x1]
    %v1283 = vlaneseq
    %v1284 = vshrl.u32 %v1283, 7
    %v1285 = vsub.s32 0, %v1284
    %v1286 = vrot.slane %v1282, %v1285
    %v1287 = vadd.f32 %v1276, %v1286
    %v1288 = vadd.f32 %v1279, %v1286
    %v1289 = vld [vmem:[%s1 + $0x1a5] sm:$0x1]
    %v1290 = vlaneseq
    %v1291 = vshrl.u32 %v1290, 7
    %v1292 = vsub.s32 0, %v1291
    %v1293 = vrot.slane %v1289, %v1292
    %1295 = vrot.lane.b32.xlu0 %v1293, 32
    %v1296 = vpop.permute.xlu0 %1295
    %v1298 = vadd.f32 %v1276, %v1296
    %v1299 = vadd.f32 %v1279, %v1296
    %v1300 = vld [vmem:[%s1 + $0x1a6] sm:$0x1]
    %v1301 = vlaneseq
    %v1302 = vshrl.u32 %v1301, 7
    %v1303 = vsub.s32 0, %v1302
    %v1304 = vrot.slane %v1300, %v1303
    %1306 = vrot.lane.b32.xlu0 %v1304, 64
    %v1307 = vpop.permute.xlu0 %1306
    %v1309 = vadd.f32 %v1276, %v1307
    %v1310 = vadd.f32 %v1279, %v1307
    %1312 = vrot.lane.b32.xlu0 %v1298, 96
    %v1313 = vpop.permute.xlu0 %1312
    %v1315 = vsel %vm255, %v1287, 0
    %v1317 = vsel %vm255, %v1313, 0
    %1319 = vmatprep.subr.mxu0 0.0
    %1320 = vmatpush1.xpose.msra.mxu0 0.0
    %1321 = vmatprep.subr.mxu0 0.0
    %1322 = vmatpush1.xpose.msra.mxu0 0.0
    %1323 = vmatprep.subr.mxu0 0.0
    %1324 = vmatpush1.xpose.msra.mxu0 0.0
    %1325 = vmatprep.subr.mxu0 0.0
    %1326 = vmatpush1.xpose.msra.mxu0 0.0
    %1327 = vmatprep.subr.mxu0 0.0
    %1328 = vmatpush1.xpose.msra.mxu0 0.0
    %1329 = vmatprep.subr.mxu0 0.0
    %1330 = vmatpush1.xpose.msra.mxu0 0.0
    %1331 = vmatprep.subr.mxu0 0.0
    %1332 = vmatpush1.xpose.msra.mxu0 0.0
    %1333 = vmatprep.subr.mxu0 0.0
    %1334 = vmatpush1.xpose.msra.mxu0 0.0
    %1335 = vmatprep.subr.mxu0 0.0
    %1336 = vmatpush1.xpose.msra.mxu0 0.0
    %1337 = vmatprep.subr.mxu0 0.0
    %1338 = vmatpush1.xpose.msra.mxu0 0.0
    %1339 = vmatprep.subr.mxu0 0.0
    %1340 = vmatpush1.xpose.msra.mxu0 0.0
    %1341 = vmatprep.subr.mxu0 0.0
    %1342 = vmatpush1.xpose.msra.mxu0 0.0
    %1343 = vmatprep.subr.mxu0 0.0
    %1344 = vmatpush1.xpose.msra.mxu0 0.0
    %1345 = vmatprep.subr.mxu0 0.0
    %1346 = vmatpush1.xpose.msra.mxu0 0.0
    %1347 = vmatprep.subr.mxu0 0.0
    %1348 = vmatpush1.xpose.msra.mxu0 0.0
    %1349 = vmatprep.subr.mxu0 0.0
    %1350 = vmatpush1.xpose.msra.mxu0 %v1317
    %1351 = vmatprep.subr.mxu0 0.0
    %1352 = vmatpush2.xpose.msra.mxu0 0.0
    %1353 = vmatprep.subr.mxu0 0.0
    %1354 = vmatpush2.xpose.msra.mxu0 0.0
    %1355 = vmatprep.subr.mxu0 0.0
    %1356 = vmatpush2.xpose.msra.mxu0 0.0
    %1357 = vmatprep.subr.mxu0 0.0
    %1358 = vmatpush2.xpose.msra.mxu0 0.0
    %1359 = vmatprep.subr.mxu0 0.0
    %1360 = vmatpush2.xpose.msra.mxu0 0.0
    %1361 = vmatprep.subr.mxu0 0.0
    %1362 = vmatpush2.xpose.msra.mxu0 0.0
    %1363 = vmatprep.subr.mxu0 0.0
    %1364 = vmatpush2.xpose.msra.mxu0 0.0
    %1365 = vmatprep.subr.mxu0 0.0
    %1366 = vmatpush2.xpose.msra.mxu0 0.0
    %1367 = vmatprep.subr.mxu0 0.0
    %1368 = vmatpush2.xpose.msra.mxu0 0.0
    %1369 = vmatprep.subr.mxu0 0.0
    %1370 = vmatpush2.xpose.msra.mxu0 0.0
    %1371 = vmatprep.subr.mxu0 0.0
    %1372 = vmatpush2.xpose.msra.mxu0 0.0
    %1373 = vmatprep.subr.mxu0 0.0
    %1374 = vmatpush2.xpose.msra.mxu0 0.0
    %1375 = vmatprep.subr.mxu0 0.0
    %1376 = vmatpush2.xpose.msra.mxu0 0.0
    %1377 = vmatprep.subr.mxu0 0.0
    %1378 = vmatpush2.xpose.msra.mxu0 0.0
    %1379 = vmatprep.subr.mxu0 0.0
    %1380 = vmatpush2.xpose.msra.mxu0 0.0
    %1381 = vmatprep.subr.mxu0 0.0
    %1382 = vmatpush2.xpose.msra.mxu0 0.0
    %1383 = vmatprep.mubr.f32.mxu0 0.0
    %1384 = vmatmul.mubr.f32.gmra.mxu0 %v1315
    %v1385 = vpop.f32.mrf.mxu0
    %v1386 = vadd.f32 0.0, %v1385
    %v1387 = vpop.f32.mrf.mxu0
    %1388 = vdwg.mxu0
    %1390 = vrot.lane.b32.xlu0 %v1299, 96
    %v1391 = vpop.permute.xlu0 %1390
    %v1393 = vsel %vm255, %v1288, 0
    %v1395 = vsel %vm255, %v1391, 0
    %1397 = vmatprep.subr.mxu0 0.0
    %1398 = vmatpush1.xpose.msra.mxu0 0.0
    %1399 = vmatprep.subr.mxu0 0.0
    %1400 = vmatpush1.xpose.msra.mxu0 0.0
    %1401 = vmatprep.subr.mxu0 0.0
    %1402 = vmatpush1.xpose.msra.mxu0 0.0
    %1403 = vmatprep.subr.mxu0 0.0
    %1404 = vmatpush1.xpose.msra.mxu0 0.0
    %1405 = vmatprep.subr.mxu0 0.0
    %1406 = vmatpush1.xpose.msra.mxu0 0.0
    %1407 = vmatprep.subr.mxu0 0.0
    %1408 = vmatpush1.xpose.msra.mxu0 0.0
    %1409 = vmatprep.subr.mxu0 0.0
    %1410 = vmatpush1.xpose.msra.mxu0 0.0
    %1411 = vmatprep.subr.mxu0 0.0
    %1412 = vmatpush1.xpose.msra.mxu0 0.0
    %1413 = vmatprep.subr.mxu0 0.0
    %1414 = vmatpush1.xpose.msra.mxu0 0.0
    %1415 = vmatprep.subr.mxu0 0.0
    %1416 = vmatpush1.xpose.msra.mxu0 0.0
    %1417 = vmatprep.subr.mxu0 0.0
    %1418 = vmatpush1.xpose.msra.mxu0 0.0
    %1419 = vmatprep.subr.mxu0 0.0
    %1420 = vmatpush1.xpose.msra.mxu0 0.0
    %1421 = vmatprep.subr.mxu0 0.0
    %1422 = vmatpush1.xpose.msra.mxu0 0.0
    %1423 = vmatprep.subr.mxu0 0.0
    %1424 = vmatpush1.xpose.msra.mxu0 0.0
    %1425 = vmatprep.subr.mxu0 0.0
    %1426 = vmatpush1.xpose.msra.mxu0 0.0
    %1427 = vmatprep.subr.mxu0 0.0
    %1428 = vmatpush1.xpose.msra.mxu0 %v1395
    %1429 = vmatprep.subr.mxu0 0.0
    %1430 = vmatpush2.xpose.msra.mxu0 0.0
    %1431 = vmatprep.subr.mxu0 0.0
    %1432 = vmatpush2.xpose.msra.mxu0 0.0
    %1433 = vmatprep.subr.mxu0 0.0
    %1434 = vmatpush2.xpose.msra.mxu0 0.0
    %1435 = vmatprep.subr.mxu0 0.0
    %1436 = vmatpush2.xpose.msra.mxu0 0.0
    %1437 = vmatprep.subr.mxu0 0.0
    %1438 = vmatpush2.xpose.msra.mxu0 0.0
    %1439 = vmatprep.subr.mxu0 0.0
    %1440 = vmatpush2.xpose.msra.mxu0 0.0
    %1441 = vmatprep.subr.mxu0 0.0
    %1442 = vmatpush2.xpose.msra.mxu0 0.0
    %1443 = vmatprep.subr.mxu0 0.0
    %1444 = vmatpush2.xpose.msra.mxu0 0.0
    %1445 = vmatprep.subr.mxu0 0.0
    %1446 = vmatpush2.xpose.msra.mxu0 0.0
    %1447 = vmatprep.subr.mxu0 0.0
    %1448 = vmatpush2.xpose.msra.mxu0 0.0
    %1449 = vmatprep.subr.mxu0 0.0
    %1450 = vmatpush2.xpose.msra.mxu0 0.0
    %1451 = vmatprep.subr.mxu0 0.0
    %1452 = vmatpush2.xpose.msra.mxu0 0.0
    %1453 = vmatprep.subr.mxu0 0.0
    %1454 = vmatpush2.xpose.msra.mxu0 0.0
    %1455 = vmatprep.subr.mxu0 0.0
    %1456 = vmatpush2.xpose.msra.mxu0 0.0
    %1457 = vmatprep.subr.mxu0 0.0
    %1458 = vmatpush2.xpose.msra.mxu0 0.0
    %1459 = vmatprep.subr.mxu0 0.0
    %1460 = vmatpush2.xpose.msra.mxu0 0.0
    %1461 = vmatprep.mubr.f32.mxu0 0.0
    %1462 = vmatmul.mubr.f32.gmra.mxu0 %v1393
    %v1463 = vpop.f32.mrf.mxu0
    %v1464 = vadd.f32 0.0, %v1463
    %v1465 = vpop.f32.mrf.mxu0
    %1466 = vdwg.mxu0
    %v1467 = vmul.f32 %v1386, 0.25
    %v1468 = vmul.f32 %v1464, 0.25
    %v1469 = vmul.f32 %v1467, 1.442695
    %v1470 = vpow.pop %v1469
    %v1471 = vmul.f32 %v1468, 1.442695
    %v1472 = vpow.pop %v1471
    %v1473 = vmul.f32 %v1470, %v129
    %v1474 = vmul.f32 %v1472, %v129
    %v1475 = vsel %vm417, %v1473, 0.0
    %1476 = vadd.xlane.f32.xlu0 %v1475
    %v1477 = vpop.xlane.xlu0 %1476
    %v1478 = vsel %vm417, %v1474, 0.0
    %1479 = vadd.xlane.f32.xlu0 %v1478
    %v1480 = vpop.xlane.xlu0 %1479
    %v1481 = vrcp.pop %v1477
    %v1482 = vrcp.pop %v1480
    %v1483 = vmul.f32 %v1473, %v1481
    %v1484 = vmul.f32 %v1474, %v1482
    %1486 = vrot.lane.b32.xlu0 %v1309, 64
    %v1487 = vpop.permute.xlu0 %1486
    %v1490 = vsel %vm417, %v1483, 0
    %1492 = vmatprep.subr.mxu0 0.0
    %1493 = vmatpush1.msra.mxu0 0.0
    %1494 = vmatprep.subr.mxu0 0.0
    %1495 = vmatpush1.msra.mxu0 0.0
    %1496 = vmatprep.subr.mxu0 0.0
    %1497 = vmatpush1.msra.mxu0 0.0
    %1498 = vmatprep.subr.mxu0 0.0
    %1499 = vmatpush1.msra.mxu0 0.0
    %1500 = vmatprep.subr.mxu0 0.0
    %1501 = vmatpush1.msra.mxu0 0.0
    %1502 = vmatprep.subr.mxu0 0.0
    %1503 = vmatpush1.msra.mxu0 0.0
    %1504 = vmatprep.subr.mxu0 0.0
    %1505 = vmatpush1.msra.mxu0 0.0
    %1506 = vmatprep.subr.mxu0 0.0
    %1507 = vmatpush1.msra.mxu0 0.0
    %1508 = vmatprep.subr.mxu0 0.0
    %1509 = vmatpush1.msra.mxu0 0.0
    %1510 = vmatprep.subr.mxu0 0.0
    %1511 = vmatpush1.msra.mxu0 0.0
    %1512 = vmatprep.subr.mxu0 0.0
    %1513 = vmatpush1.msra.mxu0 0.0
    %1514 = vmatprep.subr.mxu0 0.0
    %1515 = vmatpush1.msra.mxu0 0.0
    %1516 = vmatprep.subr.mxu0 0.0
    %1517 = vmatpush1.msra.mxu0 0.0
    %1518 = vmatprep.subr.mxu0 0.0
    %1519 = vmatpush1.msra.mxu0 0.0
    %1520 = vmatprep.subr.mxu0 0.0
    %1521 = vmatpush1.msra.mxu0 0.0
    %1522 = vmatprep.subr.mxu0 0.0
    %1523 = vmatpush1.msra.mxu0 %v1487
    %1524 = vmatprep.subr.mxu0 0.0
    %1525 = vmatpush2.msra.mxu0 0.0
    %1526 = vmatprep.subr.mxu0 0.0
    %1527 = vmatpush2.msra.mxu0 0.0
    %1528 = vmatprep.subr.mxu0 0.0
    %1529 = vmatpush2.msra.mxu0 0.0
    %1530 = vmatprep.subr.mxu0 0.0
    %1531 = vmatpush2.msra.mxu0 0.0
    %1532 = vmatprep.subr.mxu0 0.0
    %1533 = vmatpush2.msra.mxu0 0.0
    %1534 = vmatprep.subr.mxu0 0.0
    %1535 = vmatpush2.msra.mxu0 0.0
    %1536 = vmatprep.subr.mxu0 0.0
    %1537 = vmatpush2.msra.mxu0 0.0
    %1538 = vmatprep.subr.mxu0 0.0
    %1539 = vmatpush2.msra.mxu0 0.0
    %1540 = vmatprep.subr.mxu0 0.0
    %1541 = vmatpush2.msra.mxu0 0.0
    %1542 = vmatprep.subr.mxu0 0.0
    %1543 = vmatpush2.msra.mxu0 0.0
    %1544 = vmatprep.subr.mxu0 0.0
    %1545 = vmatpush2.msra.mxu0 0.0
    %1546 = vmatprep.subr.mxu0 0.0
    %1547 = vmatpush2.msra.mxu0 0.0
    %1548 = vmatprep.subr.mxu0 0.0
    %1549 = vmatpush2.msra.mxu0 0.0
    %1550 = vmatprep.subr.mxu0 0.0
    %1551 = vmatpush2.msra.mxu0 0.0
    %1552 = vmatprep.subr.mxu0 0.0
    %1553 = vmatpush2.msra.mxu0 0.0
    %1554 = vmatprep.subr.mxu0 0.0
    %1555 = vmatpush2.msra.mxu0 0.0
    %1556 = vmatprep.mubr.f32.mxu0 0.0
    %1557 = vmatmul.mubr.f32.gmra.mxu0 %v1490
    %v1558 = vpop.f32.mrf.mxu0
    %v1559 = vadd.f32 0.0, %v1558
    %v1560 = vpop.f32.mrf.mxu0
    %1561 = vdwg.mxu0
    %1563 = vrot.lane.b32.xlu0 %v1310, 64
    %v1564 = vpop.permute.xlu0 %1563
    %v1567 = vsel %vm417, %v1484, 0
    %1569 = vmatprep.subr.mxu0 0.0
    %1570 = vmatpush1.msra.mxu0 0.0
    %1571 = vmatprep.subr.mxu0 0.0
    %1572 = vmatpush1.msra.mxu0 0.0
    %1573 = vmatprep.subr.mxu0 0.0
    %1574 = vmatpush1.msra.mxu0 0.0
    %1575 = vmatprep.subr.mxu0 0.0
    %1576 = vmatpush1.msra.mxu0 0.0
    %1577 = vmatprep.subr.mxu0 0.0
    %1578 = vmatpush1.msra.mxu0 0.0
    %1579 = vmatprep.subr.mxu0 0.0
    %1580 = vmatpush1.msra.mxu0 0.0
    %1581 = vmatprep.subr.mxu0 0.0
    %1582 = vmatpush1.msra.mxu0 0.0
    %1583 = vmatprep.subr.mxu0 0.0
    %1584 = vmatpush1.msra.mxu0 0.0
    %1585 = vmatprep.subr.mxu0 0.0
    %1586 = vmatpush1.msra.mxu0 0.0
    %1587 = vmatprep.subr.mxu0 0.0
    %1588 = vmatpush1.msra.mxu0 0.0
    %1589 = vmatprep.subr.mxu0 0.0
    %1590 = vmatpush1.msra.mxu0 0.0
    %1591 = vmatprep.subr.mxu0 0.0
    %1592 = vmatpush1.msra.mxu0 0.0
    %1593 = vmatprep.subr.mxu0 0.0
    %1594 = vmatpush1.msra.mxu0 0.0
    %1595 = vmatprep.subr.mxu0 0.0
    %1596 = vmatpush1.msra.mxu0 0.0
    %1597 = vmatprep.subr.mxu0 0.0
    %1598 = vmatpush1.msra.mxu0 0.0
    %1599 = vmatprep.subr.mxu0 0.0
    %1600 = vmatpush1.msra.mxu0 %v1564
    %1601 = vmatprep.subr.mxu0 0.0
    %1602 = vmatpush2.msra.mxu0 0.0
    %1603 = vmatprep.subr.mxu0 0.0
    %1604 = vmatpush2.msra.mxu0 0.0
    %1605 = vmatprep.subr.mxu0 0.0
    %1606 = vmatpush2.msra.mxu0 0.0
    %1607 = vmatprep.subr.mxu0 0.0
    %1608 = vmatpush2.msra.mxu0 0.0
    %1609 = vmatprep.subr.mxu0 0.0
    %1610 = vmatpush2.msra.mxu0 0.0
    %1611 = vmatprep.subr.mxu0 0.0
    %1612 = vmatpush2.msra.mxu0 0.0
    %1613 = vmatprep.subr.mxu0 0.0
    %1614 = vmatpush2.msra.mxu0 0.0
    %1615 = vmatprep.subr.mxu0 0.0
    %1616 = vmatpush2.msra.mxu0 0.0
    %1617 = vmatprep.subr.mxu0 0.0
    %1618 = vmatpush2.msra.mxu0 0.0
    %1619 = vmatprep.subr.mxu0 0.0
    %1620 = vmatpush2.msra.mxu0 0.0
    %1621 = vmatprep.subr.mxu0 0.0
    %1622 = vmatpush2.msra.mxu0 0.0
    %1623 = vmatprep.subr.mxu0 0.0
    %1624 = vmatpush2.msra.mxu0 0.0
    %1625 = vmatprep.subr.mxu0 0.0
    %1626 = vmatpush2.msra.mxu0 0.0
    %1627 = vmatprep.subr.mxu0 0.0
    %1628 = vmatpush2.msra.mxu0 0.0
    %1629 = vmatprep.subr.mxu0 0.0
    %1630 = vmatpush2.msra.mxu0 0.0
    %1631 = vmatprep.subr.mxu0 0.0
    %1632 = vmatpush2.msra.mxu0 0.0
    %1633 = vmatprep.mubr.f32.mxu0 0.0
    %1634 = vmatmul.mubr.f32.gmra.mxu0 %v1567
    %v1635 = vpop.f32.mrf.mxu0
    %v1636 = vadd.f32 0.0, %v1635
    %v1637 = vpop.f32.mrf.mxu0
    %1638 = vdwg.mxu0
    %v1639 = vld [vmem:[%s1 + $0x140] sm:$0xff]
    %v1640 = vld [vmem:[%s1 + $0x148] sm:$0xff]
    %v1641 = vpack.c.bf16 %v1636, %v1559
    %v1642 = vpack.c.bf16 %v1640, %v1639
    %1643 = vrot.lane.b32.xlu0 %v1287, 112
    %v1644 = vpop.permute.xlu0 %1643
    %1645 = vrot.lane.b32.xlu0 %v1298, 80
    %v1646 = vpop.permute.xlu0 %1645
    %v1647 = vsel %vm255, %v1644, 0
    %v1649 = vsel %vm255, %v1646, 0
    %1651 = vmatprep.subr.mxu0 0.0
    %1652 = vmatpush1.xpose.msra.mxu0 0.0
    %1653 = vmatprep.subr.mxu0 0.0
    %1654 = vmatpush1.xpose.msra.mxu0 0.0
    %1655 = vmatprep.subr.mxu0 0.0
    %1656 = vmatpush1.xpose.msra.mxu0 0.0
    %1657 = vmatprep.subr.mxu0 0.0
    %1658 = vmatpush1.xpose.msra.mxu0 0.0
    %1659 = vmatprep.subr.mxu0 0.0
    %1660 = vmatpush1.xpose.msra.mxu0 0.0
    %1661 = vmatprep.subr.mxu0 0.0
    %1662 = vmatpush1.xpose.msra.mxu0 0.0
    %1663 = vmatprep.subr.mxu0 0.0
    %1664 = vmatpush1.xpose.msra.mxu0 0.0
    %1665 = vmatprep.subr.mxu0 0.0
    %1666 = vmatpush1.xpose.msra.mxu0 0.0
    %1667 = vmatprep.subr.mxu0 0.0
    %1668 = vmatpush1.xpose.msra.mxu0 0.0
    %1669 = vmatprep.subr.mxu0 0.0
    %1670 = vmatpush1.xpose.msra.mxu0 0.0
    %1671 = vmatprep.subr.mxu0 0.0
    %1672 = vmatpush1.xpose.msra.mxu0 0.0
    %1673 = vmatprep.subr.mxu0 0.0
    %1674 = vmatpush1.xpose.msra.mxu0 0.0
    %1675 = vmatprep.subr.mxu0 0.0
    %1676 = vmatpush1.xpose.msra.mxu0 0.0
    %1677 = vmatprep.subr.mxu0 0.0
    %1678 = vmatpush1.xpose.msra.mxu0 0.0
    %1679 = vmatprep.subr.mxu0 0.0
    %1680 = vmatpush1.xpose.msra.mxu0 0.0
    %1681 = vmatprep.subr.mxu0 0.0
    %1682 = vmatpush1.xpose.msra.mxu0 %v1649
    %1683 = vmatprep.subr.mxu0 0.0
    %1684 = vmatpush2.xpose.msra.mxu0 0.0
    %1685 = vmatprep.subr.mxu0 0.0
    %1686 = vmatpush2.xpose.msra.mxu0 0.0
    %1687 = vmatprep.subr.mxu0 0.0
    %1688 = vmatpush2.xpose.msra.mxu0 0.0
    %1689 = vmatprep.subr.mxu0 0.0
    %1690 = vmatpush2.xpose.msra.mxu0 0.0
    %1691 = vmatprep.subr.mxu0 0.0
    %1692 = vmatpush2.xpose.msra.mxu0 0.0
    %1693 = vmatprep.subr.mxu0 0.0
    %1694 = vmatpush2.xpose.msra.mxu0 0.0
    %1695 = vmatprep.subr.mxu0 0.0
    %1696 = vmatpush2.xpose.msra.mxu0 0.0
    %1697 = vmatprep.subr.mxu0 0.0
    %1698 = vmatpush2.xpose.msra.mxu0 0.0
    %1699 = vmatprep.subr.mxu0 0.0
    %1700 = vmatpush2.xpose.msra.mxu0 0.0
    %1701 = vmatprep.subr.mxu0 0.0
    %1702 = vmatpush2.xpose.msra.mxu0 0.0
    %1703 = vmatprep.subr.mxu0 0.0
    %1704 = vmatpush2.xpose.msra.mxu0 0.0
    %1705 = vmatprep.subr.mxu0 0.0
    %1706 = vmatpush2.xpose.msra.mxu0 0.0
    %1707 = vmatprep.subr.mxu0 0.0
    %1708 = vmatpush2.xpose.msra.mxu0 0.0
    %1709 = vmatprep.subr.mxu0 0.0
    %1710 = vmatpush2.xpose.msra.mxu0 0.0
    %1711 = vmatprep.subr.mxu0 0.0
    %1712 = vmatpush2.xpose.msra.mxu0 0.0
    %1713 = vmatprep.subr.mxu0 0.0
    %1714 = vmatpush2.xpose.msra.mxu0 0.0
    %1715 = vmatprep.mubr.f32.mxu0 0.0
    %1716 = vmatmul.mubr.f32.gmra.mxu0 %v1647
    %v1717 = vpop.f32.mrf.mxu0
    %v1718 = vadd.f32 0.0, %v1717
    %v1719 = vpop.f32.mrf.mxu0
    %1720 = vdwg.mxu0
    %1721 = vrot.lane.b32.xlu0 %v1288, 112
    %v1722 = vpop.permute.xlu0 %1721
    %1723 = vrot.lane.b32.xlu0 %v1299, 80
    %v1724 = vpop.permute.xlu0 %1723
    %v1725 = vsel %vm255, %v1722, 0
    %v1727 = vsel %vm255, %v1724, 0
    %1729 = vmatprep.subr.mxu0 0.0
    %1730 = vmatpush1.xpose.msra.mxu0 0.0
    %1731 = vmatprep.subr.mxu0 0.0
    %1732 = vmatpush1.xpose.msra.mxu0 0.0
    %1733 = vmatprep.subr.mxu0 0.0
    %1734 = vmatpush1.xpose.msra.mxu0 0.0
    %1735 = vmatprep.subr.mxu0 0.0
    %1736 = vmatpush1.xpose.msra.mxu0 0.0
    %1737 = vmatprep.subr.mxu0 0.0
    %1738 = vmatpush1.xpose.msra.mxu0 0.0
    %1739 = vmatprep.subr.mxu0 0.0
    %1740 = vmatpush1.xpose.msra.mxu0 0.0
    %1741 = vmatprep.subr.mxu0 0.0
    %1742 = vmatpush1.xpose.msra.mxu0 0.0
    %1743 = vmatprep.subr.mxu0 0.0
    %1744 = vmatpush1.xpose.msra.mxu0 0.0
    %1745 = vmatprep.subr.mxu0 0.0
    %1746 = vmatpush1.xpose.msra.mxu0 0.0
    %1747 = vmatprep.subr.mxu0 0.0
    %1748 = vmatpush1.xpose.msra.mxu0 0.0
    %1749 = vmatprep.subr.mxu0 0.0
    %1750 = vmatpush1.xpose.msra.mxu0 0.0
    %1751 = vmatprep.subr.mxu0 0.0
    %1752 = vmatpush1.xpose.msra.mxu0 0.0
    %1753 = vmatprep.subr.mxu0 0.0
    %1754 = vmatpush1.xpose.msra.mxu0 0.0
    %1755 = vmatprep.subr.mxu0 0.0
    %1756 = vmatpush1.xpose.msra.mxu0 0.0
    %1757 = vmatprep.subr.mxu0 0.0
    %1758 = vmatpush1.xpose.msra.mxu0 0.0
    %1759 = vmatprep.subr.mxu0 0.0
    %1760 = vmatpush1.xpose.msra.mxu0 %v1727
    %1761 = vmatprep.subr.mxu0 0.0
    %1762 = vmatpush2.xpose.msra.mxu0 0.0
    %1763 = vmatprep.subr.mxu0 0.0
    %1764 = vmatpush2.xpose.msra.mxu0 0.0
    %1765 = vmatprep.subr.mxu0 0.0
    %1766 = vmatpush2.xpose.msra.mxu0 0.0
    %1767 = vmatprep.subr.mxu0 0.0
    %1768 = vmatpush2.xpose.msra.mxu0 0.0
    %1769 = vmatprep.subr.mxu0 0.0
    %1770 = vmatpush2.xpose.msra.mxu0 0.0
    %1771 = vmatprep.subr.mxu0 0.0
    %1772 = vmatpush2.xpose.msra.mxu0 0.0
    %1773 = vmatprep.subr.mxu0 0.0
    %1774 = vmatpush2.xpose.msra.mxu0 0.0
    %1775 = vmatprep.subr.mxu0 0.0
    %1776 = vmatpush2.xpose.msra.mxu0 0.0
    %1777 = vmatprep.subr.mxu0 0.0
    %1778 = vmatpush2.xpose.msra.mxu0 0.0
    %1779 = vmatprep.subr.mxu0 0.0
    %1780 = vmatpush2.xpose.msra.mxu0 0.0
    %1781 = vmatprep.subr.mxu0 0.0
    %1782 = vmatpush2.xpose.msra.mxu0 0.0
    %1783 = vmatprep.subr.mxu0 0.0
    %1784 = vmatpush2.xpose.msra.mxu0 0.0
    %1785 = vmatprep.subr.mxu0 0.0
    %1786 = vmatpush2.xpose.msra.mxu0 0.0
    %1787 = vmatprep.subr.mxu0 0.0
    %1788 = vmatpush2.xpose.msra.mxu0 0.0
    %1789 = vmatprep.subr.mxu0 0.0
    %1790 = vmatpush2.xpose.msra.mxu0 0.0
    %1791 = vmatprep.subr.mxu0 0.0
    %1792 = vmatpush2.xpose.msra.mxu0 0.0
    %1793 = vmatprep.mubr.f32.mxu0 0.0
    %1794 = vmatmul.mubr.f32.gmra.mxu0 %v1725
    %v1795 = vpop.f32.mrf.mxu0
    %v1796 = vadd.f32 0.0, %v1795
    %v1797 = vpop.f32.mrf.mxu0
    %1798 = vdwg.mxu0
    %v1799 = vmul.f32 %v1718, 0.25
    %v1800 = vmul.f32 %v1796, 0.25
    %v1801 = vmul.f32 %v1799, 1.442695
    %v1802 = vpow.pop %v1801
    %v1803 = vmul.f32 %v1800, 1.442695
    %v1804 = vpow.pop %v1803
    %v1805 = vmul.f32 %v1802, %v129
    %v1806 = vmul.f32 %v1804, %v129
    %v1807 = vsel %vm417, %v1805, 0.0
    %1808 = vadd.xlane.f32.xlu0 %v1807
    %v1809 = vpop.xlane.xlu0 %1808
    %v1810 = vsel %vm417, %v1806, 0.0
    %1811 = vadd.xlane.f32.xlu0 %v1810
    %v1812 = vpop.xlane.xlu0 %1811
    %v1813 = vrcp.pop %v1809
    %v1814 = vrcp.pop %v1812
    %v1815 = vmul.f32 %v1805, %v1813
    %v1816 = vmul.f32 %v1806, %v1814
    %1817 = vrot.lane.b32.xlu0 %v1309, 48
    %v1818 = vpop.permute.xlu0 %1817
    %v1821 = vsel %vm417, %v1815, 0
    %1823 = vmatprep.subr.mxu0 0.0
    %1824 = vmatpush1.msra.mxu0 0.0
    %1825 = vmatprep.subr.mxu0 0.0
    %1826 = vmatpush1.msra.mxu0 0.0
    %1827 = vmatprep.subr.mxu0 0.0
    %1828 = vmatpush1.msra.mxu0 0.0
    %1829 = vmatprep.subr.mxu0 0.0
    %1830 = vmatpush1.msra.mxu0 0.0
    %1831 = vmatprep.subr.mxu0 0.0
    %1832 = vmatpush1.msra.mxu0 0.0
    %1833 = vmatprep.subr.mxu0 0.0
    %1834 = vmatpush1.msra.mxu0 0.0
    %1835 = vmatprep.subr.mxu0 0.0
    %1836 = vmatpush1.msra.mxu0 0.0
    %1837 = vmatprep.subr.mxu0 0.0
    %1838 = vmatpush1.msra.mxu0 0.0
    %1839 = vmatprep.subr.mxu0 0.0
    %1840 = vmatpush1.msra.mxu0 0.0
    %1841 = vmatprep.subr.mxu0 0.0
    %1842 = vmatpush1.msra.mxu0 0.0
    %1843 = vmatprep.subr.mxu0 0.0
    %1844 = vmatpush1.msra.mxu0 0.0
    %1845 = vmatprep.subr.mxu0 0.0
    %1846 = vmatpush1.msra.mxu0 0.0
    %1847 = vmatprep.subr.mxu0 0.0
    %1848 = vmatpush1.msra.mxu0 0.0
    %1849 = vmatprep.subr.mxu0 0.0
    %1850 = vmatpush1.msra.mxu0 0.0
    %1851 = vmatprep.subr.mxu0 0.0
    %1852 = vmatpush1.msra.mxu0 0.0
    %1853 = vmatprep.subr.mxu0 0.0
    %1854 = vmatpush1.msra.mxu0 %v1818
    %1855 = vmatprep.subr.mxu0 0.0
    %1856 = vmatpush2.msra.mxu0 0.0
    %1857 = vmatprep.subr.mxu0 0.0
    %1858 = vmatpush2.msra.mxu0 0.0
    %1859 = vmatprep.subr.mxu0 0.0
    %1860 = vmatpush2.msra.mxu0 0.0
    %1861 = vmatprep.subr.mxu0 0.0
    %1862 = vmatpush2.msra.mxu0 0.0
    %1863 = vmatprep.subr.mxu0 0.0
    %1864 = vmatpush2.msra.mxu0 0.0
    %1865 = vmatprep.subr.mxu0 0.0
    %1866 = vmatpush2.msra.mxu0 0.0
    %1867 = vmatprep.subr.mxu0 0.0
    %1868 = vmatpush2.msra.mxu0 0.0
    %1869 = vmatprep.subr.mxu0 0.0
    %1870 = vmatpush2.msra.mxu0 0.0
    %1871 = vmatprep.subr.mxu0 0.0
    %1872 = vmatpush2.msra.mxu0 0.0
    %1873 = vmatprep.subr.mxu0 0.0
    %1874 = vmatpush2.msra.mxu0 0.0
    %1875 = vmatprep.subr.mxu0 0.0
    %1876 = vmatpush2.msra.mxu0 0.0
    %1877 = vmatprep.subr.mxu0 0.0
    %1878 = vmatpush2.msra.mxu0 0.0
    %1879 = vmatprep.subr.mxu0 0.0
    %1880 = vmatpush2.msra.mxu0 0.0
    %1881 = vmatprep.subr.mxu0 0.0
    %1882 = vmatpush2.msra.mxu0 0.0
    %1883 = vmatprep.subr.mxu0 0.0
    %1884 = vmatpush2.msra.mxu0 0.0
    %1885 = vmatprep.subr.mxu0 0.0
    %1886 = vmatpush2.msra.mxu0 0.0
    %1887 = vmatprep.mubr.f32.mxu0 0.0
    %1888 = vmatmul.mubr.f32.gmra.mxu0 %v1821
    %v1889 = vpop.f32.mrf.mxu0
    %v1890 = vadd.f32 0.0, %v1889
    %v1891 = vpop.f32.mrf.mxu0
    %1892 = vdwg.mxu0
    %1893 = vrot.lane.b32.xlu0 %v1310, 48
    %v1894 = vpop.permute.xlu0 %1893
    %v1897 = vsel %vm417, %v1816, 0
    %1899 = vmatprep.subr.mxu0 0.0
    %1900 = vmatpush1.msra.mxu0 0.0
    %1901 = vmatprep.subr.mxu0 0.0
    %1902 = vmatpush1.msra.mxu0 0.0
    %1903 = vmatprep.subr.mxu0 0.0
    %1904 = vmatpush1.msra.mxu0 0.0
    %1905 = vmatprep.subr.mxu0 0.0
    %1906 = vmatpush1.msra.mxu0 0.0
    %1907 = vmatprep.subr.mxu0 0.0
    %1908 = vmatpush1.msra.mxu0 0.0
    %1909 = vmatprep.subr.mxu0 0.0
    %1910 = vmatpush1.msra.mxu0 0.0
    %1911 = vmatprep.subr.mxu0 0.0
    %1912 = vmatpush1.msra.mxu0 0.0
    %1913 = vmatprep.subr.mxu0 0.0
    %1914 = vmatpush1.msra.mxu0 0.0
    %1915 = vmatprep.subr.mxu0 0.0
    %1916 = vmatpush1.msra.mxu0 0.0
    %1917 = vmatprep.subr.mxu0 0.0
    %1918 = vmatpush1.msra.mxu0 0.0
    %1919 = vmatprep.subr.mxu0 0.0
    %1920 = vmatpush1.msra.mxu0 0.0
    %1921 = vmatprep.subr.mxu0 0.0
    %1922 = vmatpush1.msra.mxu0 0.0
    %1923 = vmatprep.subr.mxu0 0.0
    %1924 = vmatpush1.msra.mxu0 0.0
    %1925 = vmatprep.subr.mxu0 0.0
    %1926 = vmatpush1.msra.mxu0 0.0
    %1927 = vmatprep.subr.mxu0 0.0
    %1928 = vmatpush1.msra.mxu0 0.0
    %1929 = vmatprep.subr.mxu0 0.0
    %1930 = vmatpush1.msra.mxu0 %v1894
    %1931 = vmatprep.subr.mxu0 0.0
    %1932 = vmatpush2.msra.mxu0 0.0
    %1933 = vmatprep.subr.mxu0 0.0
    %1934 = vmatpush2.msra.mxu0 0.0
    %1935 = vmatprep.subr.mxu0 0.0
    %1936 = vmatpush2.msra.mxu0 0.0
    %1937 = vmatprep.subr.mxu0 0.0
    %1938 = vmatpush2.msra.mxu0 0.0
    %1939 = vmatprep.subr.mxu0 0.0
    %1940 = vmatpush2.msra.mxu0 0.0
    %1941 = vmatprep.subr.mxu0 0.0
    %1942 = vmatpush2.msra.mxu0 0.0
    %1943 = vmatprep.subr.mxu0 0.0
    %1944 = vmatpush2.msra.mxu0 0.0
    %1945 = vmatprep.subr.mxu0 0.0
    %1946 = vmatpush2.msra.mxu0 0.0
    %1947 = vmatprep.subr.mxu0 0.0
    %1948 = vmatpush2.msra.mxu0 0.0
    %1949 = vmatprep.subr.mxu0 0.0
    %1950 = vmatpush2.msra.mxu0 0.0
    %1951 = vmatprep.subr.mxu0 0.0
    %1952 = vmatpush2.msra.mxu0 0.0
    %1953 = vmatprep.subr.mxu0 0.0
    %1954 = vmatpush2.msra.mxu0 0.0
    %1955 = vmatprep.subr.mxu0 0.0
    %1956 = vmatpush2.msra.mxu0 0.0
    %1957 = vmatprep.subr.mxu0 0.0
    %1958 = vmatpush2.msra.mxu0 0.0
    %1959 = vmatprep.subr.mxu0 0.0
    %1960 = vmatpush2.msra.mxu0 0.0
    %1961 = vmatprep.subr.mxu0 0.0
    %1962 = vmatpush2.msra.mxu0 0.0
    %1963 = vmatprep.mubr.f32.mxu0 0.0
    %1964 = vmatmul.mubr.f32.gmra.mxu0 %v1897
    %v1965 = vpop.f32.mrf.mxu0
    %v1966 = vadd.f32 0.0, %v1965
    %v1967 = vpop.f32.mrf.mxu0
    %1968 = vdwg.mxu0
    %v1969 = vld [vmem:[%s1 + $0x150] sm:$0xff]
    %v1970 = vld [vmem:[%s1 + $0x158] sm:$0xff]
    %v1971 = vpack.c.bf16 %v1966, %v1890
    %v1972 = vpack.c.bf16 %v1970, %v1969
    %v1974 = vsel %vm255, %v1971, 0
    %1976 = vmatprep.subr.bf16.mxu0 0
    %1977 = vmatpush1.bf16.msra.mxu0 0
    %1978 = vmatprep.subr.bf16.mxu0 0
    %1979 = vmatpush1.bf16.msra.mxu0 0
    %1980 = vmatprep.subr.bf16.mxu0 0
    %1981 = vmatpush1.bf16.msra.mxu0 0
    %1982 = vmatprep.subr.bf16.mxu0 0
    %1983 = vmatpush1.bf16.msra.mxu0 0
    %1984 = vmatprep.subr.bf16.mxu0 0
    %1985 = vmatpush1.bf16.msra.mxu0 0
    %1986 = vmatprep.subr.bf16.mxu0 0
    %1987 = vmatpush1.bf16.msra.mxu0 0
    %1988 = vmatprep.subr.bf16.mxu0 0
    %1989 = vmatpush1.bf16.msra.mxu0 0
    %1990 = vmatprep.subr.bf16.mxu0 0
    %1991 = vmatpush1.bf16.msra.mxu0 %v1972
    %1992 = vmatprep.subr.bf16.mxu0 0
    %1993 = vmatpush2.bf16.msra.mxu0 0
    %1994 = vmatprep.subr.bf16.mxu0 0
    %1995 = vmatpush2.bf16.msra.mxu0 0
    %1996 = vmatprep.subr.bf16.mxu0 0
    %1997 = vmatpush2.bf16.msra.mxu0 0
    %1998 = vmatprep.subr.bf16.mxu0 0
    %1999 = vmatpush2.bf16.msra.mxu0 0
    %2000 = vmatprep.subr.bf16.mxu0 0
    %2001 = vmatpush2.bf16.msra.mxu0 0
    %2002 = vmatprep.subr.bf16.mxu0 0
    %2003 = vmatpush2.bf16.msra.mxu0 0
    %2004 = vmatprep.subr.bf16.mxu0 0
    %2005 = vmatpush2.bf16.msra.mxu0 0
    %2006 = vmatprep.subr.bf16.mxu0 0
    %2007 = vmatpush2.bf16.msra.mxu0 0
    %2008 = vmatprep.mubr.bf16.mxu0 0
    %2009 = vmatmul.mubr.bf16.gmra.mxu0 %v1974
    %v2010 = vpop.f32.mrf.mxu0
    %v2011 = vadd.f32 0.0, %v2010
    %v2012 = vpop.f32.mrf.mxu0
    %v2013 = vpop.f32.mrf.mxu0
    %v2014 = vadd.f32 0.0, %v2013
    %v2015 = vpop.f32.mrf.mxu0
    %2016 = vdwg.mxu0
    %v2018 = vsel %vm255, %v1641, 0
    %2020 = vmatprep.subr.bf16.mxu0 0
    %2021 = vmatpush1.bf16.msra.mxu0 0
    %2022 = vmatprep.subr.bf16.mxu0 0
    %2023 = vmatpush1.bf16.msra.mxu0 0
    %2024 = vmatprep.subr.bf16.mxu0 0
    %2025 = vmatpush1.bf16.msra.mxu0 0
    %2026 = vmatprep.subr.bf16.mxu0 0
    %2027 = vmatpush1.bf16.msra.mxu0 0
    %2028 = vmatprep.subr.bf16.mxu0 0
    %2029 = vmatpush1.bf16.msra.mxu0 0
    %2030 = vmatprep.subr.bf16.mxu0 0
    %2031 = vmatpush1.bf16.msra.mxu0 0
    %2032 = vmatprep.subr.bf16.mxu0 0
    %2033 = vmatpush1.bf16.msra.mxu0 0
    %2034 = vmatprep.subr.bf16.mxu0 0
    %2035 = vmatpush1.bf16.msra.mxu0 %v1642
    %2036 = vmatprep.subr.bf16.mxu0 0
    %2037 = vmatpush2.bf16.msra.mxu0 0
    %2038 = vmatprep.subr.bf16.mxu0 0
    %2039 = vmatpush2.bf16.msra.mxu0 0
    %2040 = vmatprep.subr.bf16.mxu0 0
    %2041 = vmatpush2.bf16.msra.mxu0 0
    %2042 = vmatprep.subr.bf16.mxu0 0
    %2043 = vmatpush2.bf16.msra.mxu0 0
    %2044 = vmatprep.subr.bf16.mxu0 0
    %2045 = vmatpush2.bf16.msra.mxu0 0
    %2046 = vmatprep.subr.bf16.mxu0 0
    %2047 = vmatpush2.bf16.msra.mxu0 0
    %2048 = vmatprep.subr.bf16.mxu0 0
    %2049 = vmatpush2.bf16.msra.mxu0 0
    %2050 = vmatprep.subr.bf16.mxu0 0
    %2051 = vmatpush2.bf16.msra.mxu0 0
    %2052 = vmatprep.mubr.bf16.mxu0 0
    %2053 = vmatmul.mubr.bf16.gmra.mxu0 %v2018
    %v2054 = vpop.f32.mrf.mxu0
    %v2055 = vadd.f32 %v2011, %v2054
    %v2056 = vpop.f32.mrf.mxu0
    %v2057 = vpop.f32.mrf.mxu0
    %v2058 = vadd.f32 %v2014, %v2057
    %v2059 = vpop.f32.mrf.mxu0
    %2060 = vdwg.mxu0
    %v2061 = vadd.f32 %v1189, %v2055
    %v2062 = vadd.f32 %v1190, %v2058
    %v2063 = vld [vmem:[%s1 + $0x1a7] sm:$0x1]
    %v2064 = vlaneseq
    %v2065 = vshrl.u32 %v2064, 7
    %v2066 = vsub.s32 0, %v2065
    %v2067 = vrot.slane %v2063, %v2066
    %v2068 = vadd.f32 %v2061, %v2067
    %v2069 = vadd.f32 %v2062, %v2067
    %v2070 = vld [vmem:[%s1 + $0x1a2] sm:$0x1]
    %v2071 = vld [vmem:[%s1 + $0x1a3] sm:$0x1]
    %v2072 = vsel %vm132, %v2068, 0.0
    %2073 = vadd.xlane.f32.xlu0 %v2072
    %v2074 = vpop.xlane.xlu0 %2073
    %v2075 = vsel %vm132, %v2069, 0.0
    %2076 = vadd.xlane.f32.xlu0 %v2075
    %v2077 = vpop.xlane.xlu0 %2076
    %v2078 = vmul.f32 %v2074, %v139
    %v2079 = vmul.f32 %v2077, %v139
    %v2080 = vsub.f32 %v2068, %v2078
    %v2081 = vsub.f32 %v2069, %v2079
    %v2082 = vmul.f32 %v2080, %v2080
    %v2083 = vmul.f32 %v2081, %v2081
    %v2084 = vsel %vm132, %v2082, 0.0
    %2085 = vadd.xlane.f32.xlu0 %v2084
    %v2086 = vpop.xlane.xlu0 %2085
    %v2087 = vsel %vm132, %v2083, 0.0
    %2088 = vadd.xlane.f32.xlu0 %v2087
    %v2089 = vpop.xlane.xlu0 %2088
    %v2090 = vmul.f32 %v2086, %v139
    %v2091 = vmul.f32 %v2089, %v139
    %v2092 = vadd.f32 %v2090, 1e-12
    %v2093 = vadd.f32 %v2091, 1e-12
    %v2094 = vrsqrt.pop %v2092
    %v2095 = vrsqrt.pop %v2093
    %v2096 = vmul.f32 %v2080, %v2094
    %v2097 = vmul.f32 %v2081, %v2095
    %v2098 = vlaneseq
    %v2099 = vshrl.u32 %v2098, 7
    %v2100 = vsub.s32 0, %v2099
    %v2101 = vrot.slane %v2070, %v2100
    %v2102 = vmul.f32 %v2096, %v2101
    %v2103 = vmul.f32 %v2097, %v2101
    %v2104 = vlaneseq
    %v2105 = vshrl.u32 %v2104, 7
    %v2106 = vsub.s32 0, %v2105
    %v2107 = vrot.slane %v2071, %v2106
    %v2108 = vadd.f32 %v2102, %v2107
    %v2109 = vadd.f32 %v2103, %v2107
    %v2110 = vld [vmem:[%s3 + $0x20] sm:$0xff]
    %v2111 = vld [vmem:[%s3 + $0x28] sm:$0xff]
    %v2112 = vld [vmem:[%s3 + $0x30] sm:$0xff]
    %v2113 = vld [vmem:[%s3 + $0x38] sm:$0xff]
    %v2114 = vld [vmem:[%s3 + $0x41] sm:$0x1]
    %v2115 = vpack.c.bf16 %v2109, %v2108
    %v2116 = vpack.c.bf16 %v2111, %v2110
    %v2117 = vpack.c.bf16 %v2113, %v2112
    %v2118 = vlaneseq
    %v2119 = vshrl.u32 %v2118, 7
    %v2120 = vsub.s32 0, %v2119
    %v2121 = vrot.slane %v2114, %v2120
    %v2123 = vsel %vm132, %v2115, 0
    %2125 = vmatprep.subr.bf16.mxu0 0
    %2126 = vmatpush1.bf16.msra.mxu0 0
    %2127 = vmatprep.subr.bf16.mxu0 0
    %2128 = vmatpush1.bf16.msra.mxu0 0
    %2129 = vmatprep.subr.bf16.mxu0 0
    %2130 = vmatpush1.bf16.msra.mxu0 0
    %2131 = vmatprep.subr.bf16.mxu0 0
    %2132 = vmatpush1.bf16.msra.mxu0 0
    %2133 = vmatprep.subr.bf16.mxu0 0
    %2134 = vmatpush1.bf16.msra.mxu0 0
    %2135 = vmatprep.subr.bf16.mxu0 0
    %2136 = vmatpush1.bf16.msra.mxu0 0
    %2137 = vmatprep.subr.bf16.mxu0 0
    %2138 = vmatpush1.bf16.msra.mxu0 %v2117
    %2139 = vmatprep.subr.bf16.mxu0 0
    %2140 = vmatpush1.bf16.msra.mxu0 %v2116
    %2141 = vmatprep.subr.bf16.mxu0 0
    %2142 = vmatpush2.bf16.msra.mxu0 0
    %2143 = vmatprep.subr.bf16.mxu0 0
    %2144 = vmatpush2.bf16.msra.mxu0 0
    %2145 = vmatprep.subr.bf16.mxu0 0
    %2146 = vmatpush2.bf16.msra.mxu0 0
    %2147 = vmatprep.subr.bf16.mxu0 0
    %2148 = vmatpush2.bf16.msra.mxu0 0
    %2149 = vmatprep.subr.bf16.mxu0 0
    %2150 = vmatpush2.bf16.msra.mxu0 0
    %2151 = vmatprep.subr.bf16.mxu0 0
    %2152 = vmatpush2.bf16.msra.mxu0 0
    %2153 = vmatprep.subr.bf16.mxu0 0
    %2154 = vmatpush2.bf16.msra.mxu0 0
    %2155 = vmatprep.subr.bf16.mxu0 0
    %2156 = vmatpush2.bf16.msra.mxu0 0
    %2157 = vmatprep.mubr.bf16.mxu0 0
    %2158 = vmatmul.mubr.bf16.gmra.mxu0 %v2123
    %v2159 = vpop.f32.mrf.mxu0
    %v2160 = vadd.f32 %v2121, %v2159
    %v2161 = vpop.f32.mrf.mxu0
    %v2162 = vpop.f32.mrf.mxu0
    %v2163 = vadd.f32 %v2121, %v2162
    %v2164 = vpop.f32.mrf.mxu0
    %2165 = vdwg.mxu0
    %v2166 = vmul.f32 %v2160, %v2160
    %v2167 = vmul.f32 %v2163, %v2163
    %v2168 = vmul.f32 %v2160, %v2166
    %v2169 = vmul.f32 %v2163, %v2167
    %v2170 = vmul.f32 %v2168, 0.044715
    %v2171 = vmul.f32 %v2169, 0.044715
    %v2172 = vadd.f32 %v2160, %v2170
    %v2173 = vadd.f32 %v2163, %v2171
    %v2174 = vmul.f32 %v2172, 0.7978846
    %v2175 = vmul.f32 %v2173, 0.7978846
    %v2176 = vtanh.pop %v2174
    %v2177 = vtanh.pop %v2175
    %v2178 = vadd.f32 %v2176, 1.0
    %v2179 = vadd.f32 %v2177, 1.0
    %v2180 = vmul.f32 %v2178, 0.5
    %v2181 = vmul.f32 %v2179, 0.5
    %v2182 = vmul.f32 %v2160, %v2180
    %v2183 = vmul.f32 %v2163, %v2181
    %v2184 = vld [vmem:[%s1 + $0x160] sm:$0xff]
    %v2185 = vld [vmem:[%s1 + $0x168] sm:$0xff]
    %v2186 = vld [vmem:[%s1 + $0x170] sm:$0xff]
    %v2187 = vld [vmem:[%s1 + $0x178] sm:$0xff]
    %v2188 = vld [vmem:[%s1 + $0x180] sm:$0xff]
    %v2189 = vld [vmem:[%s1 + $0x188] sm:$0xff]
    %v2190 = vld [vmem:[%s1 + $0x190] sm:$0xff]
    %v2191 = vld [vmem:[%s1 + $0x198] sm:$0xff]
    %v2192 = vpack.c.bf16 %v2183, %v2182
    %v2193 = vpack.c.bf16 %v2185, %v2184
    %v2194 = vpack.c.bf16 %v2187, %v2186
    %v2195 = vpack.c.bf16 %v2189, %v2188
    %v2196 = vpack.c.bf16 %v2191, %v2190
    %v2197 = vld [vmem:[%s1 + $0x1a8] sm:$0x1]
    %v2198 = vlaneseq
    %v2199 = vshrl.u32 %v2198, 7
    %v2200 = vsub.s32 0, %v2199
    %v2201 = vrot.slane %v2197, %v2200
    %v2203 = vsel %vm66, %v2192, 0
    %2205 = vmatprep.subr.bf16.mxu0 0
    %2206 = vmatpush1.bf16.msra.mxu0 0
    %2207 = vmatprep.subr.bf16.mxu0 0
    %2208 = vmatpush1.bf16.msra.mxu0 0
    %2209 = vmatprep.subr.bf16.mxu0 0
    %2210 = vmatpush1.bf16.msra.mxu0 0
    %2211 = vmatprep.subr.bf16.mxu0 0
    %2212 = vmatpush1.bf16.msra.mxu0 0
    %2213 = vmatprep.subr.bf16.mxu0 0
    %2214 = vmatpush1.bf16.msra.mxu0 %v2196
    %2215 = vmatprep.subr.bf16.mxu0 0
    %2216 = vmatpush1.bf16.msra.mxu0 %v2195
    %2217 = vmatprep.subr.bf16.mxu0 0
    %2218 = vmatpush1.bf16.msra.mxu0 %v2194
    %2219 = vmatprep.subr.bf16.mxu0 0
    %2220 = vmatpush1.bf16.msra.mxu0 %v2193
    %2221 = vmatprep.subr.bf16.mxu0 0
    %2222 = vmatpush2.bf16.msra.mxu0 0
    %2223 = vmatprep.subr.bf16.mxu0 0
    %2224 = vmatpush2.bf16.msra.mxu0 0
    %2225 = vmatprep.subr.bf16.mxu0 0
    %2226 = vmatpush2.bf16.msra.mxu0 0
    %2227 = vmatprep.subr.bf16.mxu0 0
    %2228 = vmatpush2.bf16.msra.mxu0 0
    %2229 = vmatprep.subr.bf16.mxu0 0
    %2230 = vmatpush2.bf16.msra.mxu0 0
    %2231 = vmatprep.subr.bf16.mxu0 0
    %2232 = vmatpush2.bf16.msra.mxu0 0
    %2233 = vmatprep.subr.bf16.mxu0 0
    %2234 = vmatpush2.bf16.msra.mxu0 0
    %2235 = vmatprep.subr.bf16.mxu0 0
    %2236 = vmatpush2.bf16.msra.mxu0 0
    %2237 = vmatprep.mubr.bf16.mxu0 0
    %2238 = vmatmul.mubr.bf16.gmra.mxu0 %v2203
    %v2239 = vpop.f32.mrf.mxu0
    %v2240 = vadd.f32 %v2201, %v2239
    %v2241 = vpop.f32.mrf.mxu0
    %v2242 = vpop.f32.mrf.mxu0
    %v2243 = vadd.f32 %v2201, %v2242
    %v2244 = vpop.f32.mrf.mxu0
    %2245 = vdwg.mxu0
    %v2246 = vadd.f32 %v2068, %v2240
    %v2247 = vadd.f32 %v2069, %v2243
    %v2249 = vrot.slane %v2247, 7
    %v2251 = vsel %vm115, %v2246, %v2249
    %v2252 = vld [vmem:[%s1 + $0xca] sm:$0x1]
    %v2253 = vld [vmem:[%s1 + $0xcb] sm:$0x1]
    %vm2254 = vcmask 254976
    %v2255 = vsel %vm2254, %v2251, 0.0
    %2256 = vadd.xlane.f32.xlu0 %v2255
    %v2257 = vpop.xlane.xlu0 %2256
    %v2258 = vmul.f32 %v2257, %v139
    %v2259 = vsub.f32 %v2251, %v2258
    %v2260 = vmul.f32 %v2259, %v2259
    %v2261 = vsel %vm2254, %v2260, 0.0
    %2262 = vadd.xlane.f32.xlu0 %v2261
    %v2263 = vpop.xlane.xlu0 %2262
    %v2264 = vmul.f32 %v2263, %v139
    %v2265 = vadd.f32 %v2264, 1e-12
    %v2266 = vrsqrt.pop %v2265
    %v2267 = vmul.f32 %v2259, %v2266
    %v2268 = vlaneseq
    %v2269 = vshrl.u32 %v2268, 7
    %v2270 = vsub.s32 0, %v2269
    %v2271 = vrot.slane %v2252, %v2270
    %v2272 = vmul.f32 %v2267, %v2271
    %v2273 = vlaneseq
    %v2274 = vshrl.u32 %v2273, 7
    %v2275 = vsub.s32 0, %v2274
    %v2276 = vrot.slane %v2253, %v2275
    %v2277 = vadd.f32 %v2272, %v2276
    %v2278 = vsel %vm132, %v2277, 0.0
    %vm2279 = vcmask 1041408
    %v2280 = vsel %vm2279, %v2278, 0.0
    %2281 = vst [vmem:[%s4] sm:$0xff] %v2280
    %v2282 = vld [vmem:[%s1 + $0xcc] sm:$0x1]
    %v2283 = vlaneseq
    %v2284 = vshrl.u32 %v2283, 7
    %v2285 = vsub.s32 0, %v2284
    %v2286 = vrot.slane %v2282, %v2285
    %v2287 = vmul.f32 %v2277, %v2286
    %v2288 = vsel %vm2254, %v2287, 0.0
    %2289 = vadd.xlane.f32.xlu0 %v2288
    %v2290 = vpop.xlane.xlu0 %2289
    %v2291 = vld [vmem:[%s1 + $0xcd] sm:$0x1]
    %v2292 = vlaneseq
    %v2293 = vshrl.u32 %v2292, 7
    %v2294 = vsub.s32 0, %v2293
    %v2295 = vrot.slane %v2291, %v2294
    %v2296 = vadd.f32 %v2290, %v2295
    %v2297 = vsel %vm2279, %v2296, -1.0
    %2299 = vset.pattern.permute.xlu0 0
    %2300 = vperm.xlu0 %2299, %v2297
    %v2301 = vpop.permute.xlu0 %2300
    %vm2303 = vcmp.gt.f32.partialorder %v2301, 0.0
    %v2304 = vsel %vm2303, 1, 0
    %2305 = vst [vmem:[#allocation2] sm:$0xff] %v2304
    // Predicated region
    $region18: #{vit_contrastive_forward.1} parent=1 // pred_check
      _
    $region19: #{vit_contrastive_forward.1} parent=1 // pred_check_branch
      %2307 = sbr.rel (0) target = $region21
    $region20: #{vit_contrastive_forward.1} parent=1 // pred_region
      _
    $region21: #{vit_contrastive_forward.1} parent=1 // pred_fallthru
      _
    // Predicated region
    $region22: #{vit_contrastive_forward.1} parent=1 // pred_check
      _
    $region23: #{vit_contrastive_forward.1} parent=1 // pred_check_branch
      %2309 = sbr.rel (0) target = $region25
    $region24: #{vit_contrastive_forward.1} parent=1 // pred_region
      %s2311 = ssub.s32 128, 128
      %2312 = vsyncadd [#allocation3], %s2311
      %s2314 = sshll.u32 [#allocation2], 4
      %s2315 = int_to_ptr.vmem [resolvable:$true] %s2314
      %2317 = dma.vmem_to_hbm [thread:$0]  %s2315, 128, %s5, [#allocation3]
    $region25: #{vit_contrastive_forward.1} parent=1 // pred_fallthru
      _
    // Predicated region
    $region26: #{vit_contrastive_forward.1} parent=1 // pred_check
      _
    $region27: #{vit_contrastive_forward.1} parent=1 // pred_check_branch
      %2319 = sbr.rel (0) target = $region29
    $region28: #{vit_contrastive_forward.1} parent=1 // pred_region
      _
    $region29: #{vit_contrastive_forward.1} parent=1 // pred_fallthru
      _
    // Predicated region
    $region30: #{vit_contrastive_forward.1} parent=1 // pred_check
      _
    $region31: #{vit_contrastive_forward.1} parent=1 // pred_check_branch
      %2321 = sbr.rel (0) target = $region33
    $region32: #{vit_contrastive_forward.1} parent=1 // pred_region
      %2322 = dma.done [#allocation3], 128
    $region33: #{vit_contrastive_forward.1} parent=1 // pred_fallthru
      _
    %2323 = vsyncpa [#allocation3], 1

</llo_original>
